<compile_context>
chip_gen: v5e
topology: v5e:2x2
jax: 0.10.0
libtpu: 0.0.40
codegen_flags: <defaults>
</compile_context>

<pallas_src>
import functools

import jax
import jax.numpy as jnp
from jax.experimental import pallas as pl
from jax.experimental.pallas import tpu as pltpu


_VOCAB_CHUNK = 512    # one-hot columns processed per inner step
_MXU_ROWS = 256       # MXU-native M tile on v6e/v7x (128 suffices on v5e)


def _round_up(x, m):
    return (x + m - 1) // m * m


# ----------------------------------------------------------------------------
# Small-vocab path: VMEM-resident table, one-hot x table on the MXU.
# ----------------------------------------------------------------------------
def _onehot_gather_kernel(idx_ref, w_ref, out_ref, acc_ref, *, vc):
    # idx_ref : (TB, 1) int32    -- this step's flattened token indices
    # w_ref   : (P, Vp, D) bf16  -- bf16 planes of the table (single VMEM copy)
    # out_ref : (TB, D)          -- gathered rows for this token block
    # acc_ref : (TB, D) f32      -- accumulator scratch
    tb, _ = out_ref.shape
    p, v_pad, _ = w_ref.shape
    nc = v_pad // vc                                           # static

    idx = idx_ref[...]                                         # (TB, 1)
    # Hoisted out of the chunk loop (JAX does not CSE broadcast_in_dim).
    base = jax.lax.broadcasted_iota(jnp.int32, (tb, vc), 1)

    acc_ref[...] = jnp.zeros_like(acc_ref)

    def one_chunk(col0):
        # 0/1 one-hot is exact in bf16, so the DEFAULT-precision bf16 MXU
        # matmul below selects rows exactly (products accumulate in f32).
        onehot = ((idx - col0) == base).astype(jnp.bfloat16)   # (TB, vc)
        for k in range(p):                 # static: 1 (bf16) or 3 (f32 split)
            acc_ref[...] += jnp.dot(onehot, w_ref[k, pl.ds(col0, vc), :],
                                    preferred_element_type=jnp.float32)

    if nc == 1:
        one_chunk(0)
    else:
        def body(c, carry):
            one_chunk(pl.multiple_of(c * vc, vc))
            return carry
        jax.lax.fori_loop(0, nc, body, 0)

    out_ref[...] = acc_ref[...].astype(out_ref.dtype)


def _split_bf16_planes(weight):
    """bf16 planes whose (f32) sum reconstructs the table exactly."""
    if weight.dtype == jnp.bfloat16:
        return weight[None]                                    # (1, V, D)
    w = weight.astype(jnp.float32)
    w0 = w.astype(jnp.bfloat16)
    r1 = w - w0.astype(jnp.float32)
    w1 = r1.astype(jnp.bfloat16)
    r2 = r1 - w1.astype(jnp.float32)
    w2 = r2.astype(jnp.bfloat16)
    return jnp.stack([w0, w1, w2])                             # (3, V, D)


def _embedding_small_vocab(idx_flat, weight, token_block):
    (n,) = idx_flat.shape
    v, d = weight.shape
    out_dtype = weight.dtype

    planes = _split_bf16_planes(weight)
    p = planes.shape[0]

    # Pad vocab so every in-kernel chunk is full.
    vc = min(_VOCAB_CHUNK, _round_up(v, 8))
    v_pad = _round_up(v, vc)
    if v_pad != v:
        planes = jnp.pad(planes, ((0, 0), (0, v_pad - v), (0, 0)))

    table_bytes = p * v_pad * d * 2                            # ONE resident copy
    assert table_bytes <= 16 * 1024 * 1024, (
        "embedding table too large for the VMEM-resident one-hot path; "
        "it should have been routed to the row-gather path")

    # Token block: MXU-friendly multiple of 256; keep >= 2 grid steps when
    # there is enough work so both v7x TensorCores get a share.
    tb = min(_round_up(token_block, _MXU_ROWS), _round_up(n, _MXU_ROWS))
    if tb >= n and n > _MXU_ROWS:
        tb = max(_MXU_ROWS, _round_up(-(-n // 2), _MXU_ROWS))
    n_pad = _round_up(n, tb)
    if n_pad != n:
        idx_flat = jnp.pad(idx_flat, (0, n_pad - n))           # pad -> row 0
    idx2d = idx_flat.reshape((n_pad, 1))

    # Explicit VMEM budget: 1x table + pipelined idx/out blocks + scratch + temps.
    vmem_bytes = (
        table_bytes
        + 2 * tb * 128 * 4                                     # idx block (lane-padded), x2 bufs
        + 2 * tb * d * jnp.dtype(out_dtype).itemsize           # output block, x2 bufs
        + tb * d * 4                                           # f32 accumulator scratch
        + tb * vc * 8                                          # one-hot / iota temporaries
    )
    vmem_limit = int(min(64 << 20, max(16 << 20, 2 * vmem_bytes)))

    kernel = functools.partial(_onehot_gather_kernel, vc=vc)
    idx_spec = pl.BlockSpec((tb, 1), lambda i: (i, 0))
    out_spec = pl.BlockSpec((tb, d), lambda i: (i, 0))

    def call(table_spec):
        return pl.pallas_call(
            kernel,
            out_shape=jax.ShapeDtypeStruct((n_pad, d), out_dtype),
            grid_spec=pltpu.PrefetchScalarGridSpec(
                num_scalar_prefetch=0,
                grid=(n_pad // tb,),
                in_specs=[idx_spec, table_spec],
                out_specs=out_spec,
                scratch_shapes=[pltpu.VMEM((tb, d), jnp.float32)],
            ),
            compiler_params=pltpu.CompilerParams(
                dimension_semantics=("parallel",),
                vmem_limit_bytes=vmem_limit,
            ),
        )(idx2d, planes)

    try:
        # Whole table resident in VMEM as a single, un-pipelined copy
        # (no 2x double-buffering of a constant-index block).
        out = call(pl.BlockSpec(memory_space=pltpu.MemorySpace.VMEM))
    except Exception:
        # Fallback for Pallas versions without whole-operand VMEM placement:
        # constant-index pipelined block (still correct, just double-buffered).
        out = call(pl.BlockSpec((p, v_pad, d), lambda i: (0, 0, 0)))

    return out[:n]


# ----------------------------------------------------------------------------
# Large-vocab path: per-row DMA gather driven by scalar-prefetched indices.
# ----------------------------------------------------------------------------
def _row_gather_kernel(idx_smem, w_row_ref, out_ref):
    # idx_smem  : scalar-prefetched flattened indices (consumed by index_maps)
    # w_row_ref : (1, D) -- the DMA'd table row for this token
    # out_ref   : (TG, D) -- output block, resident across the inner grid axis
    del idx_smem
    j = pl.program_id(1)
    out_ref[pl.ds(j, 1), :] = w_row_ref[...].astype(out_ref.dtype)


def _embedding_row_gather(idx_flat, weight, token_block=256):
    # Bandwidth-bound gather; the MXU is untouched and work no longer scales
    # with vocabulary size.
    # TODO(synk): out-of-range indices hit the DMA bounds check here instead of
    # raising like torch.nn.functional.embedding.
    (n,) = idx_flat.shape
    v, d = weight.shape
    tg = min(token_block, _round_up(n, 8))
    n_pad = _round_up(n, tg)
    if n_pad != n:
        idx_flat = jnp.pad(idx_flat, (0, n_pad - n))

    out = pl.pallas_call(
        _row_gather_kernel,
        out_shape=jax.ShapeDtypeStruct((n_pad, d), weight.dtype),
        grid_spec=pltpu.PrefetchScalarGridSpec(
            num_scalar_prefetch=1,
            grid=(n_pad // tg, tg),
            in_specs=[pl.BlockSpec((pl.Element(1), d),
                                   lambda i, j, idx: (idx[i * tg + j], 0))],
            out_specs=pl.BlockSpec((tg, d), lambda i, j, idx: (i, 0)),
        ),
        compiler_params=pltpu.CompilerParams(
            dimension_semantics=("parallel", "arbitrary"),
            vmem_limit_bytes=int(min(64 << 20,
                                     max(16 << 20,
                                         8 * tg * d * weight.dtype.itemsize))),
        ),
    )(idx_flat, weight)
    return out[:n]


# ----------------------------------------------------------------------------
# Public wrapper: same forward semantics as torch.nn.functional.embedding.
# ----------------------------------------------------------------------------
def embedding_pallas(indices, weight, *, token_block=512, vocab_crossover=4096):
    """out = weight[indices]."""
    b, s = indices.shape
    v, d = weight.shape
    idx_flat = indices.reshape((b * s,)).astype(jnp.int32)
    if v <= vocab_crossover:
        out = _embedding_small_vocab(idx_flat, weight, token_block)
    else:
        out = _embedding_row_gather(idx_flat, weight)
    return out.reshape((b, s, d))


if __name__ == "__main__":
    key = jax.random.PRNGKey(0)
    k_idx, k_w = jax.random.split(key)

    # Small shapes consistent with EmbeddingFuncNet.forward(indices, weight).
    B, S, V, D = 2, 8, 16, 128
    indices = jax.random.randint(k_idx, (B, S), 0, V, dtype=jnp.int32)
    weight = jax.random.normal(k_w, (V, D), dtype=jnp.float32)

    out = embedding_pallas(indices, weight)
    out = jax.block_until_ready(out)

    ref = weight[indices]
    assert out.shape == (B, S, D)
    assert out.dtype == weight.dtype
    assert jnp.allclose(out, ref, rtol=1e-6, atol=1e-6), \
        "Pallas embedding mismatch vs reference"

    print("KERNEL_OK")
</pallas_src>

<mosaic_0001>
module attributes {stable_mosaic.version = 11 : i64} {
  func.func @_onehot_gather_kernel(%arg0: i32, %arg1: memref<256x1xi32, #tpu.memory_space<vmem>>, %arg2: memref<3x16x128xbf16, #tpu.memory_space<vmem>>, %arg3: memref<256x128xf32, #tpu.memory_space<vmem>>, %arg4: memref<256x128xf32, #tpu.memory_space<vmem>>) attributes {dimension_semantics = [#tpu.dimension_semantics<parallel>], iteration_bounds = array<i64: 1>, scalar_prefetch = 0 : i64, scratch_operands = 1 : i64, tpu.core_type = #tpu.core_type<tc>, window_params = [{transform_indices = @transform_0, window_bounds = array<i64: 256, 1>}, {pipeline_mode = #tpu.pipeline_mode<synchronous>, transform_indices = @transform_1, window_bounds = array<i64: 3, 16, 128>}, {transform_indices = @transform_2, window_bounds = array<i64: 256, 128>}]} {
    %c0 = arith.constant 0 : index
    %c0_0 = arith.constant 0 : index
    %0 = vector.load %arg1[%c0, %c0_0] : memref<256x1xi32, #tpu.memory_space<vmem>>, vector<256x1xi32>
    %1 = tpu.iota {dimensions = array<i32: 1>} : vector<256x16xi32>
    %cst = arith.constant 0.000000e+00 : f32
    %2 = vector.broadcast %cst : f32 to vector<256x128xf32>
    %c0_1 = arith.constant 0 : index
    %c0_2 = arith.constant 0 : index
    %3 = vector.load %arg4[%c0_1, %c0_2] : memref<256x128xf32, #tpu.memory_space<vmem>>, vector<256x128xf32>
    tpu.vector_store %arg4[%c0_1, %c0_2], %2 {strides = array<i32>} : memref<256x128xf32, #tpu.memory_space<vmem>>, vector<256x128xf32>,
    %c0_i32 = arith.constant 0 : i32
    %4 = vector.broadcast %c0_i32 : i32 to vector<256x1xi32>
    %5 = arith.subi %0, %4 : vector<256x1xi32>
    %6 = vector.broadcast %5 : vector<256x1xi32> to vector<256x16xi32>
    %7 = arith.cmpi eq, %6, %1 : vector<256x16xi32>
    %8 = arith.extui %7 : vector<256x16xi1> to vector<256x16xi32>
    %9 = arith.sitofp %8 : vector<256x16xi32> to vector<256x16xf32>
    %10 = arith.truncf %9 : vector<256x16xf32> to vector<256x16xbf16>
    %c0_3 = arith.constant 0 : index
    %c0_4 = arith.constant 0 : index
    %11 = vector.load %arg4[%c0_3, %c0_4] : memref<256x128xf32, #tpu.memory_space<vmem>>, vector<256x128xf32>
    %c0_5 = arith.constant 0 : index
    %c0_6 = arith.constant 0 : index
    %c0_7 = arith.constant 0 : index
    %12 = vector.load %arg2[%c0_5, %c0_6, %c0_7] : memref<3x16x128xbf16, #tpu.memory_space<vmem>>, vector<1x16x128xbf16>
    %13 = vector.shape_cast %12 : vector<1x16x128xbf16> to vector<16x128xbf16>
    %cst_8 = arith.constant dense<0.000000e+00> : vector<256x128xf32>
    %14 = tpu.matmul %10, %13, %cst_8 {dimension_numbers = #tpu.dot_dimension_numbers<[1], [0], [0], [1], [0, 0, 1, 1], [], []>} : vector<256x16xbf16>, vector<16x128xbf16>, vector<256x128xf32> -> vector<256x128xf32>
    %15 = arith.addf %11, %14 : vector<256x128xf32>
    %c0_9 = arith.constant 0 : index
    %c0_10 = arith.constant 0 : index
    %16 = vector.load %arg4[%c0_9, %c0_10] : memref<256x128xf32, #tpu.memory_space<vmem>>, vector<256x128xf32>
    tpu.vector_store %arg4[%c0_9, %c0_10], %15 {strides = array<i32>} : memref<256x128xf32, #tpu.memory_space<vmem>>, vector<256x128xf32>,
    %c0_11 = arith.constant 0 : index
    %c0_12 = arith.constant 0 : index
    %17 = vector.load %arg4[%c0_11, %c0_12] : memref<256x128xf32, #tpu.memory_space<vmem>>, vector<256x128xf32>
    %c1 = arith.constant 1 : index
    %c0_13 = arith.constant 0 : index
    %c0_14 = arith.constant 0 : index
    %18 = vector.load %arg2[%c1, %c0_13, %c0_14] : memref<3x16x128xbf16, #tpu.memory_space<vmem>>, vector<1x16x128xbf16>
    %19 = vector.shape_cast %18 : vector<1x16x128xbf16> to vector<16x128xbf16>
    %cst_15 = arith.constant dense<0.000000e+00> : vector<256x128xf32>
    %20 = tpu.matmul %10, %19, %cst_15 {dimension_numbers = #tpu.dot_dimension_numbers<[1], [0], [0], [1], [0, 0, 1, 1], [], []>} : vector<256x16xbf16>, vector<16x128xbf16>, vector<256x128xf32> -> vector<256x128xf32>
    %21 = arith.addf %17, %20 : vector<256x128xf32>
    %c0_16 = arith.constant 0 : index
    %c0_17 = arith.constant 0 : index
    %22 = vector.load %arg4[%c0_16, %c0_17] : memref<256x128xf32, #tpu.memory_space<vmem>>, vector<256x128xf32>
    tpu.vector_store %arg4[%c0_16, %c0_17], %21 {strides = array<i32>} : memref<256x128xf32, #tpu.memory_space<vmem>>, vector<256x128xf32>,
    %c0_18 = arith.constant 0 : index
    %c0_19 = arith.constant 0 : index
    %23 = vector.load %arg4[%c0_18, %c0_19] : memref<256x128xf32, #tpu.memory_space<vmem>>, vector<256x128xf32>
    %c2 = arith.constant 2 : index
    %c0_20 = arith.constant 0 : index
    %c0_21 = arith.constant 0 : index
    %24 = vector.load %arg2[%c2, %c0_20, %c0_21] : memref<3x16x128xbf16, #tpu.memory_space<vmem>>, vector<1x16x128xbf16>
    %25 = vector.shape_cast %24 : vector<1x16x128xbf16> to vector<16x128xbf16>
    %cst_22 = arith.constant dense<0.000000e+00> : vector<256x128xf32>
    %26 = tpu.matmul %10, %25, %cst_22 {dimension_numbers = #tpu.dot_dimension_numbers<[1], [0], [0], [1], [0, 0, 1, 1], [], []>} : vector<256x16xbf16>, vector<16x128xbf16>, vector<256x128xf32> -> vector<256x128xf32>
    %27 = arith.addf %23, %26 : vector<256x128xf32>
    %c0_23 = arith.constant 0 : index
    %c0_24 = arith.constant 0 : index
    %28 = vector.load %arg4[%c0_23, %c0_24] : memref<256x128xf32, #tpu.memory_space<vmem>>, vector<256x128xf32>
    tpu.vector_store %arg4[%c0_23, %c0_24], %27 {strides = array<i32>} : memref<256x128xf32, #tpu.memory_space<vmem>>, vector<256x128xf32>,
    %c0_25 = arith.constant 0 : index
    %c0_26 = arith.constant 0 : index
    %29 = vector.load %arg4[%c0_25, %c0_26] : memref<256x128xf32, #tpu.memory_space<vmem>>, vector<256x128xf32>
    %c0_27 = arith.constant 0 : index
    %c0_28 = arith.constant 0 : index
    %30 = vector.load %arg3[%c0_27, %c0_28] : memref<256x128xf32, #tpu.memory_space<vmem>>, vector<256x128xf32>
    tpu.vector_store %arg3[%c0_27, %c0_28], %29 {strides = array<i32>} : memref<256x128xf32, #tpu.memory_space<vmem>>, vector<256x128xf32>,
    return
  }
  func.func @transform_0(%arg0: i32) -> (i32, i32) {
    %c0_i32 = arith.constant 0 : i32
    %c0_i32_0 = arith.constant 0 : i32
    return %arg0, %c0_i32 : i32, i32
  }
  func.func @transform_1(%arg0: i32) -> (i32, i32, i32) {
    %c0_i32 = arith.constant 0 : i32
    %c0_i32_0 = arith.constant 0 : i32
    %c0_i32_1 = arith.constant 0 : i32
    %c0_i32_2 = arith.constant 0 : i32
    return %c0_i32, %c0_i32_0, %c0_i32_1 : i32, i32, i32
  }
  func.func @transform_2(%arg0: i32) -> (i32, i32) {
    %c0_i32 = arith.constant 0 : i32
    %c0_i32_0 = arith.constant 0 : i32
    return %arg0, %c0_i32 : i32, i32
  }
}

module attributes {stable_mosaic.version = 11 : i64} {
  func.func @_onehot_gather_kernel(%arg0: i32, %arg1: memref<256x1xi32, #tpu.memory_space<vmem>>, %arg2: memref<3x16x128xbf16, #tpu.memory_space<vmem>>, %arg3: memref<256x128xf32, #tpu.memory_space<vmem>>, %arg4: memref<256x128xf32, #tpu.memory_space<vmem>>) attributes {dimension_semantics = [#tpu.dimension_semantics<parallel>], iteration_bounds = array<i64: 1>, scalar_prefetch = 0 : i64, scratch_operands = 1 : i64, tpu.core_type = #tpu.core_type<tc>, window_params = [{transform_indices = @transform_0, window_bounds = array<i64: 256, 1>}, {pipeline_mode = #tpu.pipeline_mode<synchronous>, transform_indices = @transform_1, window_bounds = array<i64: 3, 16, 128>}, {transform_indices = @transform_2, window_bounds = array<i64: 256, 128>}]} {
    %c0 = arith.constant 0 : index
    %c0_0 = arith.constant 0 : index
    %0 = vector.load %arg1[%c0, %c0_0] : memref<256x1xi32, #tpu.memory_space<vmem>>, vector<256x1xi32>
    %1 = tpu.iota {dimensions = array<i32: 1>} : vector<256x16xi32>
    %cst = arith.constant 0.000000e+00 : f32
    %2 = vector.broadcast %cst : f32 to vector<256x128xf32>
    %c0_1 = arith.constant 0 : index
    %c0_2 = arith.constant 0 : index
    %3 = vector.load %arg4[%c0_1, %c0_2] : memref<256x128xf32, #tpu.memory_space<vmem>>, vector<256x128xf32>
    tpu.vector_store %arg4[%c0_1, %c0_2], %2 {strides = array<i32>} : memref<256x128xf32, #tpu.memory_space<vmem>>, vector<256x128xf32>,
    %c0_i32 = arith.constant 0 : i32
    %4 = vector.broadcast %c0_i32 : i32 to vector<256x1xi32>
    %5 = arith.subi %0, %4 : vector<256x1xi32>
    %6 = vector.broadcast %5 : vector<256x1xi32> to vector<256x16xi32>
    %7 = arith.cmpi eq, %6, %1 : vector<256x16xi32>
    %8 = arith.extui %7 : vector<256x16xi1> to vector<256x16xi32>
    %9 = arith.sitofp %8 : vector<256x16xi32> to vector<256x16xf32>
    %10 = arith.truncf %9 : vector<256x16xf32> to vector<256x16xbf16>
    %c0_3 = arith.constant 0 : index
    %c0_4 = arith.constant 0 : index
    %11 = vector.load %arg4[%c0_3, %c0_4] : memref<256x128xf32, #tpu.memory_space<vmem>>, vector<256x128xf32>
    %c0_5 = arith.constant 0 : index
    %c0_6 = arith.constant 0 : index
    %c0_7 = arith.constant 0 : index
    %12 = vector.load %arg2[%c0_5, %c0_6, %c0_7] : memref<3x16x128xbf16, #tpu.memory_space<vmem>>, vector<1x16x128xbf16>
    %13 = vector.shape_cast %12 : vector<1x16x128xbf16> to vector<16x128xbf16>
    %cst_8 = arith.constant dense<0.000000e+00> : vector<256x128xf32>
    %14 = tpu.matmul %10, %13, %cst_8 {dimension_numbers = #tpu.dot_dimension_numbers<[1], [0], [0], [1], [0, 0, 1, 1], [], []>} : vector<256x16xbf16>, vector<16x128xbf16>, vector<256x128xf32> -> vector<256x128xf32>
    %15 = arith.addf %11, %14 : vector<256x128xf32>
    %c0_9 = arith.constant 0 : index
    %c0_10 = arith.constant 0 : index
    %16 = vector.load %arg4[%c0_9, %c0_10] : memref<256x128xf32, #tpu.memory_space<vmem>>, vector<256x128xf32>
    tpu.vector_store %arg4[%c0_9, %c0_10], %15 {strides = array<i32>} : memref<256x128xf32, #tpu.memory_space<vmem>>, vector<256x128xf32>,
    %c0_11 = arith.constant 0 : index
    %c0_12 = arith.constant 0 : index
    %17 = vector.load %arg4[%c0_11, %c0_12] : memref<256x128xf32, #tpu.memory_space<vmem>>, vector<256x128xf32>
    %c1 = arith.constant 1 : index
    %c0_13 = arith.constant 0 : index
    %c0_14 = arith.constant 0 : index
    %18 = vector.load %arg2[%c1, %c0_13, %c0_14] : memref<3x16x128xbf16, #tpu.memory_space<vmem>>, vector<1x16x128xbf16>
    %19 = vector.shape_cast %18 : vector<1x16x128xbf16> to vector<16x128xbf16>
    %cst_15 = arith.constant dense<0.000000e+00> : vector<256x128xf32>
    %20 = tpu.matmul %10, %19, %cst_15 {dimension_numbers = #tpu.dot_dimension_numbers<[1], [0], [0], [1], [0, 0, 1, 1], [], []>} : vector<256x16xbf16>, vector<16x128xbf16>, vector<256x128xf32> -> vector<256x128xf32>
    %21 = arith.addf %17, %20 : vector<256x128xf32>
    %c0_16 = arith.constant 0 : index
    %c0_17 = arith.constant 0 : index
    %22 = vector.load %arg4[%c0_16, %c0_17] : memref<256x128xf32, #tpu.memory_space<vmem>>, vector<256x128xf32>
    tpu.vector_store %arg4[%c0_16, %c0_17], %21 {strides = array<i32>} : memref<256x128xf32, #tpu.memory_space<vmem>>, vector<256x128xf32>,
    %c0_18 = arith.constant 0 : index
    %c0_19 = arith.constant 0 : index
    %23 = vector.load %arg4[%c0_18, %c0_19] : memref<256x128xf32, #tpu.memory_space<vmem>>, vector<256x128xf32>
    %c2 = arith.constant 2 : index
    %c0_20 = arith.constant 0 : index
    %c0_21 = arith.constant 0 : index
    %24 = vector.load %arg2[%c2, %c0_20, %c0_21] : memref<3x16x128xbf16, #tpu.memory_space<vmem>>, vector<1x16x128xbf16>
    %25 = vector.shape_cast %24 : vector<1x16x128xbf16> to vector<16x128xbf16>
    %cst_22 = arith.constant dense<0.000000e+00> : vector<256x128xf32>
    %26 = tpu.matmul %10, %25, %cst_22 {dimension_numbers = #tpu.dot_dimension_numbers<[1], [0], [0], [1], [0, 0, 1, 1], [], []>} : vector<256x16xbf16>, vector<16x128xbf16>, vector<256x128xf32> -> vector<256x128xf32>
    %27 = arith.addf %23, %26 : vector<256x128xf32>
    %c0_23 = arith.constant 0 : index
    %c0_24 = arith.constant 0 : index
    %28 = vector.load %arg4[%c0_23, %c0_24] : memref<256x128xf32, #tpu.memory_space<vmem>>, vector<256x128xf32>
    tpu.vector_store %arg4[%c0_23, %c0_24], %27 {strides = array<i32>} : memref<256x128xf32, #tpu.memory_space<vmem>>, vector<256x128xf32>,
    %c0_25 = arith.constant 0 : index
    %c0_26 = arith.constant 0 : index
    %29 = vector.load %arg4[%c0_25, %c0_26] : memref<256x128xf32, #tpu.memory_space<vmem>>, vector<256x128xf32>
    %c0_27 = arith.constant 0 : index
    %c0_28 = arith.constant 0 : index
    %30 = vector.load %arg3[%c0_27, %c0_28] : memref<256x128xf32, #tpu.memory_space<vmem>>, vector<256x128xf32>
    tpu.vector_store %arg3[%c0_27, %c0_28], %29 {strides = array<i32>} : memref<256x128xf32, #tpu.memory_space<vmem>>, vector<256x128xf32>,
    return
  }
  func.func @transform_0(%arg0: i32) -> (i32, i32) {
    %c0_i32 = arith.constant 0 : i32
    %c0_i32_0 = arith.constant 0 : i32
    return %arg0, %c0_i32 : i32, i32
  }
  func.func @transform_1(%arg0: i32) -> (i32, i32, i32) {
    %c0_i32 = arith.constant 0 : i32
    %c0_i32_0 = arith.constant 0 : i32
    %c0_i32_1 = arith.constant 0 : i32
    %c0_i32_2 = arith.constant 0 : i32
    return %c0_i32, %c0_i32_0, %c0_i32_1 : i32, i32, i32
  }
  func.func @transform_2(%arg0: i32) -> (i32, i32) {
    %c0_i32 = arith.constant 0 : i32
    %c0_i32_0 = arith.constant 0 : i32
    return %arg0, %c0_i32 : i32, i32
  }
}

</mosaic_0001>

<llo_original>
// kernel: tpu_custom_call.1
$region0: #{tpu_custom_call.1}
  #allocation0 [shape = 'u32[]', space=smem, size = 0x4, offset = 0x4, fixed_abs, tag = 'smem constant byte address 0x4 - core index']
  #allocation1 [shape = 'u32[72,128]{1,0:T(1,128)}', space=vmem, size = 0x9000, scoped, tag = 'internal scratch']
  #allocation2 [shape = 'f32[256,128]{1,0:T(8,128)}', space=vmem, size = 0x20000, scoped, tag = 'scratch operand']
  %s0 = inlined_call_operand.vmem [shape: s32[256,1], index: 0, kind: input, shape index: {}]
  %s1 = inlined_call_operand.vmem [shape: bf16[3,16,128], index: 1, kind: input, shape index: {}]
  %s2 = inlined_call_operand.hbm [shape: f32[256,128], index: 2, kind: output, shape index: {}]
  %s3 = sld [smem:[#allocation0]]
  $region18: #{tpu_custom_call.1} parent=0
    _
  %s5 = ssub.s32 1, %s3
  %s6 = scalar_select 0, %s5, %s3
  $region1: #{tpu_custom_call.1} parent=0
    #allocation3 [shape = 'u8[131072]{0}', space=vmem, size = 0x20000, scoped, tag = 'output window, operand 0, single buffered']
    #allocation4 [shape = 's32[1]{0}', space=sflag, size = 0x4, scoped, tag = 'scoped memory for tpu_custom_call.1']
    %7 = vsyncpa [#allocation4], 0
    // Predicated region
    $region2: #{tpu_custom_call.1} parent=1 // pred_check
      _
    $region3: #{tpu_custom_call.1} parent=1 // pred_check_branch
      %9 = sbr.rel (0) target = $region5
    $region4: #{tpu_custom_call.1} parent=1 // pred_region
      _
    $region5: #{tpu_custom_call.1} parent=1 // pred_fallthru
      _
    // Predicated region
    $region6: #{tpu_custom_call.1} parent=1 // pred_check
      _
    $region7: #{tpu_custom_call.1} parent=1 // pred_check_branch
      %11 = sbr.rel (0) target = $region9
    $region8: #{tpu_custom_call.1} parent=1 // pred_region
      _
    $region9: #{tpu_custom_call.1} parent=1 // pred_fallthru
      _
    %v13 = vld [vmem:[%s0] sm:$0xff]
    %v14 = vld [vmem:[%s0 + $0x8] sm:$0xff]
    %v15 = vld [vmem:[%s0 + $0x10] sm:$0xff]
    %v16 = vld [vmem:[%s0 + $0x18] sm:$0xff]
    %v17 = vld [vmem:[%s0 + $0x20] sm:$0xff]
    %v18 = vld [vmem:[%s0 + $0x28] sm:$0xff]
    %v19 = vld [vmem:[%s0 + $0x30] sm:$0xff]
    %v20 = vld [vmem:[%s0 + $0x38] sm:$0xff]
    %v21 = vld [vmem:[%s0 + $0x40] sm:$0xff]
    %v22 = vld [vmem:[%s0 + $0x48] sm:$0xff]
    %v23 = vld [vmem:[%s0 + $0x50] sm:$0xff]
    %v24 = vld [vmem:[%s0 + $0x58] sm:$0xff]
    %v25 = vld [vmem:[%s0 + $0x60] sm:$0xff]
    %v26 = vld [vmem:[%s0 + $0x68] sm:$0xff]
    %v27 = vld [vmem:[%s0 + $0x70] sm:$0xff]
    %v28 = vld [vmem:[%s0 + $0x78] sm:$0xff]
    %v29 = vld [vmem:[%s0 + $0x80] sm:$0xff]
    %v30 = vld [vmem:[%s0 + $0x88] sm:$0xff]
    %v31 = vld [vmem:[%s0 + $0x90] sm:$0xff]
    %v32 = vld [vmem:[%s0 + $0x98] sm:$0xff]
    %v33 = vld [vmem:[%s0 + $0xa0] sm:$0xff]
    %v34 = vld [vmem:[%s0 + $0xa8] sm:$0xff]
    %v35 = vld [vmem:[%s0 + $0xb0] sm:$0xff]
    %v36 = vld [vmem:[%s0 + $0xb8] sm:$0xff]
    %v37 = vld [vmem:[%s0 + $0xc0] sm:$0xff]
    %v38 = vld [vmem:[%s0 + $0xc8] sm:$0xff]
    %v39 = vld [vmem:[%s0 + $0xd0] sm:$0xff]
    %v40 = vld [vmem:[%s0 + $0xd8] sm:$0xff]
    %v41 = vld [vmem:[%s0 + $0xe0] sm:$0xff]
    %v42 = vld [vmem:[%s0 + $0xe8] sm:$0xff]
    %v43 = vld [vmem:[%s0 + $0xf0] sm:$0xff]
    %v44 = vld [vmem:[%s0 + $0xf8] sm:$0xff]
    %v45 = vlaneseq
    %v46 = vand.u32 %v45, 127
    %47 = vst [vmem:[#allocation2] sm:$0xff] 0.0
    %48 = vst [vmem:[#allocation2 + $0x8] sm:$0xff] 0.0
    %49 = vst [vmem:[#allocation2 + $0x10] sm:$0xff] 0.0
    %50 = vst [vmem:[#allocation2 + $0x18] sm:$0xff] 0.0
    %51 = vst [vmem:[#allocation2 + $0x20] sm:$0xff] 0.0
    %52 = vst [vmem:[#allocation2 + $0x28] sm:$0xff] 0.0
    %53 = vst [vmem:[#allocation2 + $0x30] sm:$0xff] 0.0
    %54 = vst [vmem:[#allocation2 + $0x38] sm:$0xff] 0.0
    %55 = vst [vmem:[#allocation2 + $0x40] sm:$0xff] 0.0
    %56 = vst [vmem:[#allocation2 + $0x48] sm:$0xff] 0.0
    %57 = vst [vmem:[#allocation2 + $0x50] sm:$0xff] 0.0
    %58 = vst [vmem:[#allocation2 + $0x58] sm:$0xff] 0.0
    %59 = vst [vmem:[#allocation2 + $0x60] sm:$0xff] 0.0
    %60 = vst [vmem:[#allocation2 + $0x68] sm:$0xff] 0.0
    %61 = vst [vmem:[#allocation2 + $0x70] sm:$0xff] 0.0
    %62 = vst [vmem:[#allocation2 + $0x78] sm:$0xff] 0.0
    %63 = vst [vmem:[#allocation2 + $0x80] sm:$0xff] 0.0
    %64 = vst [vmem:[#allocation2 + $0x88] sm:$0xff] 0.0
    %65 = vst [vmem:[#allocation2 + $0x90] sm:$0xff] 0.0
    %66 = vst [vmem:[#allocation2 + $0x98] sm:$0xff] 0.0
    %67 = vst [vmem:[#allocation2 + $0xa0] sm:$0xff] 0.0
    %68 = vst [vmem:[#allocation2 + $0xa8] sm:$0xff] 0.0
    %69 = vst [vmem:[#allocation2 + $0xb0] sm:$0xff] 0.0
    %70 = vst [vmem:[#allocation2 + $0xb8] sm:$0xff] 0.0
    %71 = vst [vmem:[#allocation2 + $0xc0] sm:$0xff] 0.0
    %72 = vst [vmem:[#allocation2 + $0xc8] sm:$0xff] 0.0
    %73 = vst [vmem:[#allocation2 + $0xd0] sm:$0xff] 0.0
    %74 = vst [vmem:[#allocation2 + $0xd8] sm:$0xff] 0.0
    %75 = vst [vmem:[#allocation2 + $0xe0] sm:$0xff] 0.0
    %76 = vst [vmem:[#allocation2 + $0xe8] sm:$0xff] 0.0
    %77 = vst [vmem:[#allocation2 + $0xf0] sm:$0xff] 0.0
    %78 = vst [vmem:[#allocation2 + $0xf8] sm:$0xff] 0.0
    %79 = vset.pattern.permute.xlu0 0
    %80 = vperm.xlu0 %79, %v13
    %v81 = vpop.permute.xlu0 %80
    %82 = vset.pattern.permute.xlu0 0
    %83 = vperm.xlu0 %82, %v14
    %v84 = vpop.permute.xlu0 %83
    %85 = vset.pattern.permute.xlu0 0
    %86 = vperm.xlu0 %85, %v15
    %v87 = vpop.permute.xlu0 %86
    %88 = vset.pattern.permute.xlu0 0
    %89 = vperm.xlu0 %88, %v16
    %v90 = vpop.permute.xlu0 %89
    %91 = vset.pattern.permute.xlu0 0
    %92 = vperm.xlu0 %91, %v17
    %v93 = vpop.permute.xlu0 %92
    %94 = vset.pattern.permute.xlu0 0
    %95 = vperm.xlu0 %94, %v18
    %v96 = vpop.permute.xlu0 %95
    %97 = vset.pattern.permute.xlu0 0
    %98 = vperm.xlu0 %97, %v19
    %v99 = vpop.permute.xlu0 %98
    %100 = vset.pattern.permute.xlu0 0
    %101 = vperm.xlu0 %100, %v20
    %v102 = vpop.permute.xlu0 %101
    %103 = vset.pattern.permute.xlu0 0
    %104 = vperm.xlu0 %103, %v21
    %v105 = vpop.permute.xlu0 %104
    %106 = vset.pattern.permute.xlu0 0
    %107 = vperm.xlu0 %106, %v22
    %v108 = vpop.permute.xlu0 %107
    %109 = vset.pattern.permute.xlu0 0
    %110 = vperm.xlu0 %109, %v23
    %v111 = vpop.permute.xlu0 %110
    %112 = vset.pattern.permute.xlu0 0
    %113 = vperm.xlu0 %112, %v24
    %v114 = vpop.permute.xlu0 %113
    %115 = vset.pattern.permute.xlu0 0
    %116 = vperm.xlu0 %115, %v25
    %v117 = vpop.permute.xlu0 %116
    %118 = vset.pattern.permute.xlu0 0
    %119 = vperm.xlu0 %118, %v26
    %v120 = vpop.permute.xlu0 %119
    %121 = vset.pattern.permute.xlu0 0
    %122 = vperm.xlu0 %121, %v27
    %v123 = vpop.permute.xlu0 %122
    %124 = vset.pattern.permute.xlu0 0
    %125 = vperm.xlu0 %124, %v28
    %v126 = vpop.permute.xlu0 %125
    %127 = vset.pattern.permute.xlu0 0
    %128 = vperm.xlu0 %127, %v29
    %v129 = vpop.permute.xlu0 %128
    %130 = vset.pattern.permute.xlu0 0
    %131 = vperm.xlu0 %130, %v30
    %v132 = vpop.permute.xlu0 %131
    %133 = vset.pattern.permute.xlu0 0
    %134 = vperm.xlu0 %133, %v31
    %v135 = vpop.permute.xlu0 %134
    %136 = vset.pattern.permute.xlu0 0
    %137 = vperm.xlu0 %136, %v32
    %v138 = vpop.permute.xlu0 %137
    %139 = vset.pattern.permute.xlu0 0
    %140 = vperm.xlu0 %139, %v33
    %v141 = vpop.permute.xlu0 %140
    %142 = vset.pattern.permute.xlu0 0
    %143 = vperm.xlu0 %142, %v34
    %v144 = vpop.permute.xlu0 %143
    %145 = vset.pattern.permute.xlu0 0
    %146 = vperm.xlu0 %145, %v35
    %v147 = vpop.permute.xlu0 %146
    %148 = vset.pattern.permute.xlu0 0
    %149 = vperm.xlu0 %148, %v36
    %v150 = vpop.permute.xlu0 %149
    %151 = vset.pattern.permute.xlu0 0
    %152 = vperm.xlu0 %151, %v37
    %v153 = vpop.permute.xlu0 %152
    %154 = vset.pattern.permute.xlu0 0
    %155 = vperm.xlu0 %154, %v38
    %v156 = vpop.permute.xlu0 %155
    %157 = vset.pattern.permute.xlu0 0
    %158 = vperm.xlu0 %157, %v39
    %v159 = vpop.permute.xlu0 %158
    %160 = vset.pattern.permute.xlu0 0
    %161 = vperm.xlu0 %160, %v40
    %v162 = vpop.permute.xlu0 %161
    %163 = vset.pattern.permute.xlu0 0
    %164 = vperm.xlu0 %163, %v41
    %v165 = vpop.permute.xlu0 %164
    %166 = vset.pattern.permute.xlu0 0
    %167 = vperm.xlu0 %166, %v42
    %v168 = vpop.permute.xlu0 %167
    %169 = vset.pattern.permute.xlu0 0
    %170 = vperm.xlu0 %169, %v43
    %v171 = vpop.permute.xlu0 %170
    %172 = vset.pattern.permute.xlu0 0
    %173 = vperm.xlu0 %172, %v44
    %v174 = vpop.permute.xlu0 %173
    %vm175 = vcmp.eq.s32.totalorder %v81, %v46
    %vm176 = vcmp.eq.s32.totalorder %v84, %v46
    %vm177 = vcmp.eq.s32.totalorder %v87, %v46
    %vm178 = vcmp.eq.s32.totalorder %v90, %v46
    %vm179 = vcmp.eq.s32.totalorder %v93, %v46
    %vm180 = vcmp.eq.s32.totalorder %v96, %v46
    %vm181 = vcmp.eq.s32.totalorder %v99, %v46
    %vm182 = vcmp.eq.s32.totalorder %v102, %v46
    %vm183 = vcmp.eq.s32.totalorder %v105, %v46
    %vm184 = vcmp.eq.s32.totalorder %v108, %v46
    %vm185 = vcmp.eq.s32.totalorder %v111, %v46
    %vm186 = vcmp.eq.s32.totalorder %v114, %v46
    %vm187 = vcmp.eq.s32.totalorder %v117, %v46
    %vm188 = vcmp.eq.s32.totalorder %v120, %v46
    %vm189 = vcmp.eq.s32.totalorder %v123, %v46
    %vm190 = vcmp.eq.s32.totalorder %v126, %v46
    %vm191 = vcmp.eq.s32.totalorder %v129, %v46
    %vm192 = vcmp.eq.s32.totalorder %v132, %v46
    %vm193 = vcmp.eq.s32.totalorder %v135, %v46
    %vm194 = vcmp.eq.s32.totalorder %v138, %v46
    %vm195 = vcmp.eq.s32.totalorder %v141, %v46
    %vm196 = vcmp.eq.s32.totalorder %v144, %v46
    %vm197 = vcmp.eq.s32.totalorder %v147, %v46
    %vm198 = vcmp.eq.s32.totalorder %v150, %v46
    %vm199 = vcmp.eq.s32.totalorder %v153, %v46
    %vm200 = vcmp.eq.s32.totalorder %v156, %v46
    %vm201 = vcmp.eq.s32.totalorder %v159, %v46
    %vm202 = vcmp.eq.s32.totalorder %v162, %v46
    %vm203 = vcmp.eq.s32.totalorder %v165, %v46
    %vm204 = vcmp.eq.s32.totalorder %v168, %v46
    %vm205 = vcmp.eq.s32.totalorder %v171, %v46
    %vm206 = vcmp.eq.s32.totalorder %v174, %v46
    %v207 = vsel %vm175, 1, 0
    %v208 = vsel %vm176, 1, 0
    %v209 = vsel %vm177, 1, 0
    %v210 = vsel %vm178, 1, 0
    %v211 = vsel %vm179, 1, 0
    %v212 = vsel %vm180, 1, 0
    %v213 = vsel %vm181, 1, 0
    %v214 = vsel %vm182, 1, 0
    %v215 = vsel %vm183, 1, 0
    %v216 = vsel %vm184, 1, 0
    %v217 = vsel %vm185, 1, 0
    %v218 = vsel %vm186, 1, 0
    %v219 = vsel %vm187, 1, 0
    %v220 = vsel %vm188, 1, 0
    %v221 = vsel %vm189, 1, 0
    %v222 = vsel %vm190, 1, 0
    %v223 = vsel %vm191, 1, 0
    %v224 = vsel %vm192, 1, 0
    %v225 = vsel %vm193, 1, 0
    %v226 = vsel %vm194, 1, 0
    %v227 = vsel %vm195, 1, 0
    %v228 = vsel %vm196, 1, 0
    %v229 = vsel %vm197, 1, 0
    %v230 = vsel %vm198, 1, 0
    %v231 = vsel %vm199, 1, 0
    %v232 = vsel %vm200, 1, 0
    %v233 = vsel %vm201, 1, 0
    %v234 = vsel %vm202, 1, 0
    %v235 = vsel %vm203, 1, 0
    %v236 = vsel %vm204, 1, 0
    %v237 = vsel %vm205, 1, 0
    %v238 = vsel %vm206, 1, 0
    %v239 = vcvt.s32.f32 %v207
    %v240 = vcvt.s32.f32 %v208
    %v241 = vcvt.s32.f32 %v209
    %v242 = vcvt.s32.f32 %v210
    %v243 = vcvt.s32.f32 %v211
    %v244 = vcvt.s32.f32 %v212
    %v245 = vcvt.s32.f32 %v213
    %v246 = vcvt.s32.f32 %v214
    %v247 = vcvt.s32.f32 %v215
    %v248 = vcvt.s32.f32 %v216
    %v249 = vcvt.s32.f32 %v217
    %v250 = vcvt.s32.f32 %v218
    %v251 = vcvt.s32.f32 %v219
    %v252 = vcvt.s32.f32 %v220
    %v253 = vcvt.s32.f32 %v221
    %v254 = vcvt.s32.f32 %v222
    %v255 = vcvt.s32.f32 %v223
    %v256 = vcvt.s32.f32 %v224
    %v257 = vcvt.s32.f32 %v225
    %v258 = vcvt.s32.f32 %v226
    %v259 = vcvt.s32.f32 %v227
    %v260 = vcvt.s32.f32 %v228
    %v261 = vcvt.s32.f32 %v229
    %v262 = vcvt.s32.f32 %v230
    %v263 = vcvt.s32.f32 %v231
    %v264 = vcvt.s32.f32 %v232
    %v265 = vcvt.s32.f32 %v233
    %v266 = vcvt.s32.f32 %v234
    %v267 = vcvt.s32.f32 %v235
    %v268 = vcvt.s32.f32 %v236
    %v269 = vcvt.s32.f32 %v237
    %v270 = vcvt.s32.f32 %v238
    %v271 = vpack.c.bf16 %v240, %v239
    %v272 = vpack.c.bf16 %v242, %v241
    %v273 = vpack.c.bf16 %v244, %v243
    %v274 = vpack.c.bf16 %v246, %v245
    %v275 = vpack.c.bf16 %v248, %v247
    %v276 = vpack.c.bf16 %v250, %v249
    %v277 = vpack.c.bf16 %v252, %v251
    %v278 = vpack.c.bf16 %v254, %v253
    %v279 = vpack.c.bf16 %v256, %v255
    %v280 = vpack.c.bf16 %v258, %v257
    %v281 = vpack.c.bf16 %v260, %v259
    %v282 = vpack.c.bf16 %v262, %v261
    %v283 = vpack.c.bf16 %v264, %v263
    %v284 = vpack.c.bf16 %v266, %v265
    %v285 = vpack.c.bf16 %v268, %v267
    %v286 = vpack.c.bf16 %v270, %v269
    %v287 = vld [vmem:[#allocation2] sm:$0xff]
    %v288 = vld [vmem:[#allocation2 + $0x8] sm:$0xff]
    %v289 = vld [vmem:[#allocation2 + $0x10] sm:$0xff]
    %v290 = vld [vmem:[#allocation2 + $0x18] sm:$0xff]
    %v291 = vld [vmem:[#allocation2 + $0x20] sm:$0xff]
    %v292 = vld [vmem:[#allocation2 + $0x28] sm:$0xff]
    %v293 = vld [vmem:[#allocation2 + $0x30] sm:$0xff]
    %v294 = vld [vmem:[#allocation2 + $0x38] sm:$0xff]
    %v295 = vld [vmem:[#allocation2 + $0x40] sm:$0xff]
    %v296 = vld [vmem:[#allocation2 + $0x48] sm:$0xff]
    %v297 = vld [vmem:[#allocation2 + $0x50] sm:$0xff]
    %v298 = vld [vmem:[#allocation2 + $0x58] sm:$0xff]
    %v299 = vld [vmem:[#allocation2 + $0x60] sm:$0xff]
    %v300 = vld [vmem:[#allocation2 + $0x68] sm:$0xff]
    %v301 = vld [vmem:[#allocation2 + $0x70] sm:$0xff]
    %v302 = vld [vmem:[#allocation2 + $0x78] sm:$0xff]
    %v303 = vld [vmem:[#allocation2 + $0x80] sm:$0xff]
    %v304 = vld [vmem:[#allocation2 + $0x88] sm:$0xff]
    %v305 = vld [vmem:[#allocation2 + $0x90] sm:$0xff]
    %v306 = vld [vmem:[#allocation2 + $0x98] sm:$0xff]
    %v307 = vld [vmem:[#allocation2 + $0xa0] sm:$0xff]
    %v308 = vld [vmem:[#allocation2 + $0xa8] sm:$0xff]
    %v309 = vld [vmem:[#allocation2 + $0xb0] sm:$0xff]
    %v310 = vld [vmem:[#allocation2 + $0xb8] sm:$0xff]
    %v311 = vld [vmem:[#allocation2 + $0xc0] sm:$0xff]
    %v312 = vld [vmem:[#allocation2 + $0xc8] sm:$0xff]
    %v313 = vld [vmem:[#allocation2 + $0xd0] sm:$0xff]
    %v314 = vld [vmem:[#allocation2 + $0xd8] sm:$0xff]
    %v315 = vld [vmem:[#allocation2 + $0xe0] sm:$0xff]
    %v316 = vld [vmem:[#allocation2 + $0xe8] sm:$0xff]
    %v317 = vld [vmem:[#allocation2 + $0xf0] sm:$0xff]
    %v318 = vld [vmem:[#allocation2 + $0xf8] sm:$0xff]
    %v319 = vld [vmem:[%s1] sm:$0xf]
    %v320 = vld [vmem:[%s1 + $0x4] sm:$0xf]
    %v323 = vunpack.c.l.b16 %v319
    %v324 = vunpack.c.l.b16 %v320
    %v325 = vpack.c.b16 %v324, %v323
    %vm327 = vcmask 130048
    %v329 = vsel %vm327, %v271, 0
    %v332 = vsel %vm327, %v272, 0
    %v335 = vsel %vm327, %v273, 0
    %v338 = vsel %vm327, %v274, 0
    %v341 = vsel %vm327, %v275, 0
    %v344 = vsel %vm327, %v276, 0
    %v347 = vsel %vm327, %v277, 0
    %v350 = vsel %vm327, %v278, 0
    %v353 = vsel %vm327, %v279, 0
    %v356 = vsel %vm327, %v280, 0
    %v359 = vsel %vm327, %v281, 0
    %v362 = vsel %vm327, %v282, 0
    %v365 = vsel %vm327, %v283, 0
    %v368 = vsel %vm327, %v284, 0
    %v371 = vsel %vm327, %v285, 0
    %v374 = vsel %vm327, %v286, 0
    %376 = vmatpush.bf16.msra.mxu0 0
    %377 = vmatpush.bf16.msra.mxu0 0
    %378 = vmatpush.bf16.msra.mxu0 0
    %379 = vmatpush.bf16.msra.mxu0 0
    %380 = vmatpush.bf16.msra.mxu0 0
    %381 = vmatpush.bf16.msra.mxu0 0
    %382 = vmatpush.bf16.msra.mxu0 0
    %383 = vmatpush.bf16.msra.mxu0 %v325
    %384 = vmatmul.bf16.gmra.mxu0 %v329
    %v385 = vpop.f32.mrf.mxu0
    %v386 = vadd.f32 0.0, %v385
    %v387 = vpop.f32.mrf.mxu0
    %v388 = vadd.f32 0.0, %v387
    %389 = vmatmul.bf16.gmra.mxu0 %v332
    %v390 = vpop.f32.mrf.mxu0
    %v391 = vadd.f32 0.0, %v390
    %v392 = vpop.f32.mrf.mxu0
    %v393 = vadd.f32 0.0, %v392
    %394 = vmatmul.bf16.gmra.mxu0 %v335
    %v395 = vpop.f32.mrf.mxu0
    %v396 = vadd.f32 0.0, %v395
    %v397 = vpop.f32.mrf.mxu0
    %v398 = vadd.f32 0.0, %v397
    %399 = vmatmul.bf16.gmra.mxu0 %v338
    %v400 = vpop.f32.mrf.mxu0
    %v401 = vadd.f32 0.0, %v400
    %v402 = vpop.f32.mrf.mxu0
    %v403 = vadd.f32 0.0, %v402
    %404 = vmatmul.bf16.gmra.mxu0 %v341
    %v405 = vpop.f32.mrf.mxu0
    %v406 = vadd.f32 0.0, %v405
    %v407 = vpop.f32.mrf.mxu0
    %v408 = vadd.f32 0.0, %v407
    %409 = vmatmul.bf16.gmra.mxu0 %v344
    %v410 = vpop.f32.mrf.mxu0
    %v411 = vadd.f32 0.0, %v410
    %v412 = vpop.f32.mrf.mxu0
    %v413 = vadd.f32 0.0, %v412
    %414 = vmatmul.bf16.gmra.mxu0 %v347
    %v415 = vpop.f32.mrf.mxu0
    %v416 = vadd.f32 0.0, %v415
    %v417 = vpop.f32.mrf.mxu0
    %v418 = vadd.f32 0.0, %v417
    %419 = vmatmul.bf16.gmra.mxu0 %v350
    %v420 = vpop.f32.mrf.mxu0
    %v421 = vadd.f32 0.0, %v420
    %v422 = vpop.f32.mrf.mxu0
    %v423 = vadd.f32 0.0, %v422
    %424 = vmatmul.bf16.gmra.mxu0 %v353
    %v425 = vpop.f32.mrf.mxu0
    %v426 = vadd.f32 0.0, %v425
    %v427 = vpop.f32.mrf.mxu0
    %v428 = vadd.f32 0.0, %v427
    %429 = vmatmul.bf16.gmra.mxu0 %v356
    %v430 = vpop.f32.mrf.mxu0
    %v431 = vadd.f32 0.0, %v430
    %v432 = vpop.f32.mrf.mxu0
    %v433 = vadd.f32 0.0, %v432
    %434 = vmatmul.bf16.gmra.mxu0 %v359
    %v435 = vpop.f32.mrf.mxu0
    %v436 = vadd.f32 0.0, %v435
    %v437 = vpop.f32.mrf.mxu0
    %v438 = vadd.f32 0.0, %v437
    %439 = vmatmul.bf16.gmra.mxu0 %v362
    %v440 = vpop.f32.mrf.mxu0
    %v441 = vadd.f32 0.0, %v440
    %v442 = vpop.f32.mrf.mxu0
    %v443 = vadd.f32 0.0, %v442
    %444 = vmatmul.bf16.gmra.mxu0 %v365
    %v445 = vpop.f32.mrf.mxu0
    %v446 = vadd.f32 0.0, %v445
    %v447 = vpop.f32.mrf.mxu0
    %v448 = vadd.f32 0.0, %v447
    %449 = vmatmul.bf16.gmra.mxu0 %v368
    %v450 = vpop.f32.mrf.mxu0
    %v451 = vadd.f32 0.0, %v450
    %v452 = vpop.f32.mrf.mxu0
    %v453 = vadd.f32 0.0, %v452
    %454 = vmatmul.bf16.gmra.mxu0 %v371
    %v455 = vpop.f32.mrf.mxu0
    %v456 = vadd.f32 0.0, %v455
    %v457 = vpop.f32.mrf.mxu0
    %v458 = vadd.f32 0.0, %v457
    %459 = vmatmul.bf16.gmra.mxu0 %v374
    %v460 = vpop.f32.mrf.mxu0
    %v461 = vadd.f32 0.0, %v460
    %v462 = vpop.f32.mrf.mxu0
    %v463 = vadd.f32 0.0, %v462
    %464 = vdwg.mxu0
    %v465 = vadd.f32 %v287, %v386
    %v466 = vadd.f32 %v288, %v388
    %v467 = vadd.f32 %v289, %v391
    %v468 = vadd.f32 %v290, %v393
    %v469 = vadd.f32 %v291, %v396
    %v470 = vadd.f32 %v292, %v398
    %v471 = vadd.f32 %v293, %v401
    %v472 = vadd.f32 %v294, %v403
    %v473 = vadd.f32 %v295, %v406
    %v474 = vadd.f32 %v296, %v408
    %v475 = vadd.f32 %v297, %v411
    %v476 = vadd.f32 %v298, %v413
    %v477 = vadd.f32 %v299, %v416
    %v478 = vadd.f32 %v300, %v418
    %v479 = vadd.f32 %v301, %v421
    %v480 = vadd.f32 %v302, %v423
    %v481 = vadd.f32 %v303, %v426
    %v482 = vadd.f32 %v304, %v428
    %v483 = vadd.f32 %v305, %v431
    %v484 = vadd.f32 %v306, %v433
    %v485 = vadd.f32 %v307, %v436
    %v486 = vadd.f32 %v308, %v438
    %v487 = vadd.f32 %v309, %v441
    %v488 = vadd.f32 %v310, %v443
    %v489 = vadd.f32 %v311, %v446
    %v490 = vadd.f32 %v312, %v448
    %v491 = vadd.f32 %v313, %v451
    %v492 = vadd.f32 %v314, %v453
    %v493 = vadd.f32 %v315, %v456
    %v494 = vadd.f32 %v316, %v458
    %v495 = vadd.f32 %v317, %v461
    %v496 = vadd.f32 %v318, %v463
    %497 = vst [vmem:[#allocation2] sm:$0xff] %v465
    %498 = vst [vmem:[#allocation2 + $0x8] sm:$0xff] %v466
    %499 = vst [vmem:[#allocation2 + $0x10] sm:$0xff] %v467
    %500 = vst [vmem:[#allocation2 + $0x18] sm:$0xff] %v468
    %501 = vst [vmem:[#allocation2 + $0x20] sm:$0xff] %v469
    %502 = vst [vmem:[#allocation2 + $0x28] sm:$0xff] %v470
    %503 = vst [vmem:[#allocation2 + $0x30] sm:$0xff] %v471
    %504 = vst [vmem:[#allocation2 + $0x38] sm:$0xff] %v472
    %505 = vst [vmem:[#allocation2 + $0x40] sm:$0xff] %v473
    %506 = vst [vmem:[#allocation2 + $0x48] sm:$0xff] %v474
    %507 = vst [vmem:[#allocation2 + $0x50] sm:$0xff] %v475
    %508 = vst [vmem:[#allocation2 + $0x58] sm:$0xff] %v476
    %509 = vst [vmem:[#allocation2 + $0x60] sm:$0xff] %v477
    %510 = vst [vmem:[#allocation2 + $0x68] sm:$0xff] %v478
    %511 = vst [vmem:[#allocation2 + $0x70] sm:$0xff] %v479
    %512 = vst [vmem:[#allocation2 + $0x78] sm:$0xff] %v480
    %513 = vst [vmem:[#allocation2 + $0x80] sm:$0xff] %v481
    %514 = vst [vmem:[#allocation2 + $0x88] sm:$0xff] %v482
    %515 = vst [vmem:[#allocation2 + $0x90] sm:$0xff] %v483
    %516 = vst [vmem:[#allocation2 + $0x98] sm:$0xff] %v484
    %517 = vst [vmem:[#allocation2 + $0xa0] sm:$0xff] %v485
    %518 = vst [vmem:[#allocation2 + $0xa8] sm:$0xff] %v486
    %519 = vst [vmem:[#allocation2 + $0xb0] sm:$0xff] %v487
    %520 = vst [vmem:[#allocation2 + $0xb8] sm:$0xff] %v488
    %521 = vst [vmem:[#allocation2 + $0xc0] sm:$0xff] %v489
    %522 = vst [vmem:[#allocation2 + $0xc8] sm:$0xff] %v490
    %523 = vst [vmem:[#allocation2 + $0xd0] sm:$0xff] %v491
    %524 = vst [vmem:[#allocation2 + $0xd8] sm:$0xff] %v492
    %525 = vst [vmem:[#allocation2 + $0xe0] sm:$0xff] %v493
    %526 = vst [vmem:[#allocation2 + $0xe8] sm:$0xff] %v494
    %527 = vst [vmem:[#allocation2 + $0xf0] sm:$0xff] %v495
    %528 = vst [vmem:[#allocation2 + $0xf8] sm:$0xff] %v496
    %v529 = vld [vmem:[#allocation2] sm:$0xff]
    %v530 = vld [vmem:[#allocation2 + $0x8] sm:$0xff]
    %v531 = vld [vmem:[#allocation2 + $0x10] sm:$0xff]
    %v532 = vld [vmem:[#allocation2 + $0x18] sm:$0xff]
    %v533 = vld [vmem:[#allocation2 + $0x20] sm:$0xff]
    %v534 = vld [vmem:[#allocation2 + $0x28] sm:$0xff]
    %v535 = vld [vmem:[#allocation2 + $0x30] sm:$0xff]
    %v536 = vld [vmem:[#allocation2 + $0x38] sm:$0xff]
    %v537 = vld [vmem:[#allocation2 + $0x40] sm:$0xff]
    %v538 = vld [vmem:[#allocation2 + $0x48] sm:$0xff]
    %v539 = vld [vmem:[#allocation2 + $0x50] sm:$0xff]
    %v540 = vld [vmem:[#allocation2 + $0x58] sm:$0xff]
    %v541 = vld [vmem:[#allocation2 + $0x60] sm:$0xff]
    %v542 = vld [vmem:[#allocation2 + $0x68] sm:$0xff]
    %v543 = vld [vmem:[#allocation2 + $0x70] sm:$0xff]
    %v544 = vld [vmem:[#allocation2 + $0x78] sm:$0xff]
    %v545 = vld [vmem:[#allocation2 + $0x80] sm:$0xff]
    %v546 = vld [vmem:[#allocation2 + $0x88] sm:$0xff]
    %v547 = vld [vmem:[#allocation2 + $0x90] sm:$0xff]
    %v548 = vld [vmem:[#allocation2 + $0x98] sm:$0xff]
    %v549 = vld [vmem:[#allocation2 + $0xa0] sm:$0xff]
    %v550 = vld [vmem:[#allocation2 + $0xa8] sm:$0xff]
    %v551 = vld [vmem:[#allocation2 + $0xb0] sm:$0xff]
    %v552 = vld [vmem:[#allocation2 + $0xb8] sm:$0xff]
    %v553 = vld [vmem:[#allocation2 + $0xc0] sm:$0xff]
    %v554 = vld [vmem:[#allocation2 + $0xc8] sm:$0xff]
    %v555 = vld [vmem:[#allocation2 + $0xd0] sm:$0xff]
    %v556 = vld [vmem:[#allocation2 + $0xd8] sm:$0xff]
    %v557 = vld [vmem:[#allocation2 + $0xe0] sm:$0xff]
    %v558 = vld [vmem:[#allocation2 + $0xe8] sm:$0xff]
    %v559 = vld [vmem:[#allocation2 + $0xf0] sm:$0xff]
    %v560 = vld [vmem:[#allocation2 + $0xf8] sm:$0xff]
    %s561 = scalar_lea.vmem %s1, 8
    %v562 = vld [vmem:[%s561] sm:$0xf]
    %v563 = vld [vmem:[%s561 + $0x4] sm:$0xf]
    %v566 = vunpack.c.l.b16 %v562
    %v567 = vunpack.c.l.b16 %v563
    %v568 = vpack.c.b16 %v567, %v566
    %570 = vmatpush.bf16.msra.mxu0 0
    %571 = vmatpush.bf16.msra.mxu0 0
    %572 = vmatpush.bf16.msra.mxu0 0
    %573 = vmatpush.bf16.msra.mxu0 0
    %574 = vmatpush.bf16.msra.mxu0 0
    %575 = vmatpush.bf16.msra.mxu0 0
    %576 = vmatpush.bf16.msra.mxu0 0
    %577 = vmatpush.bf16.msra.mxu0 %v568
    %578 = vmatmul.bf16.gmra.mxu0 %v329
    %v579 = vpop.f32.mrf.mxu0
    %v580 = vadd.f32 0.0, %v579
    %v581 = vpop.f32.mrf.mxu0
    %v582 = vadd.f32 0.0, %v581
    %583 = vmatmul.bf16.gmra.mxu0 %v332
    %v584 = vpop.f32.mrf.mxu0
    %v585 = vadd.f32 0.0, %v584
    %v586 = vpop.f32.mrf.mxu0
    %v587 = vadd.f32 0.0, %v586
    %588 = vmatmul.bf16.gmra.mxu0 %v335
    %v589 = vpop.f32.mrf.mxu0
    %v590 = vadd.f32 0.0, %v589
    %v591 = vpop.f32.mrf.mxu0
    %v592 = vadd.f32 0.0, %v591
    %593 = vmatmul.bf16.gmra.mxu0 %v338
    %v594 = vpop.f32.mrf.mxu0
    %v595 = vadd.f32 0.0, %v594
    %v596 = vpop.f32.mrf.mxu0
    %v597 = vadd.f32 0.0, %v596
    %598 = vmatmul.bf16.gmra.mxu0 %v341
    %v599 = vpop.f32.mrf.mxu0
    %v600 = vadd.f32 0.0, %v599
    %v601 = vpop.f32.mrf.mxu0
    %v602 = vadd.f32 0.0, %v601
    %603 = vmatmul.bf16.gmra.mxu0 %v344
    %v604 = vpop.f32.mrf.mxu0
    %v605 = vadd.f32 0.0, %v604
    %v606 = vpop.f32.mrf.mxu0
    %v607 = vadd.f32 0.0, %v606
    %608 = vmatmul.bf16.gmra.mxu0 %v347
    %v609 = vpop.f32.mrf.mxu0
    %v610 = vadd.f32 0.0, %v609
    %v611 = vpop.f32.mrf.mxu0
    %v612 = vadd.f32 0.0, %v611
    %613 = vmatmul.bf16.gmra.mxu0 %v350
    %v614 = vpop.f32.mrf.mxu0
    %v615 = vadd.f32 0.0, %v614
    %v616 = vpop.f32.mrf.mxu0
    %v617 = vadd.f32 0.0, %v616
    %618 = vmatmul.bf16.gmra.mxu0 %v353
    %v619 = vpop.f32.mrf.mxu0
    %v620 = vadd.f32 0.0, %v619
    %v621 = vpop.f32.mrf.mxu0
    %v622 = vadd.f32 0.0, %v621
    %623 = vmatmul.bf16.gmra.mxu0 %v356
    %v624 = vpop.f32.mrf.mxu0
    %v625 = vadd.f32 0.0, %v624
    %v626 = vpop.f32.mrf.mxu0
    %v627 = vadd.f32 0.0, %v626
    %628 = vmatmul.bf16.gmra.mxu0 %v359
    %v629 = vpop.f32.mrf.mxu0
    %v630 = vadd.f32 0.0, %v629
    %v631 = vpop.f32.mrf.mxu0
    %v632 = vadd.f32 0.0, %v631
    %633 = vmatmul.bf16.gmra.mxu0 %v362
    %v634 = vpop.f32.mrf.mxu0
    %v635 = vadd.f32 0.0, %v634
    %v636 = vpop.f32.mrf.mxu0
    %v637 = vadd.f32 0.0, %v636
    %638 = vmatmul.bf16.gmra.mxu0 %v365
    %v639 = vpop.f32.mrf.mxu0
    %v640 = vadd.f32 0.0, %v639
    %v641 = vpop.f32.mrf.mxu0
    %v642 = vadd.f32 0.0, %v641
    %643 = vmatmul.bf16.gmra.mxu0 %v368
    %v644 = vpop.f32.mrf.mxu0
    %v645 = vadd.f32 0.0, %v644
    %v646 = vpop.f32.mrf.mxu0
    %v647 = vadd.f32 0.0, %v646
    %648 = vmatmul.bf16.gmra.mxu0 %v371
    %v649 = vpop.f32.mrf.mxu0
    %v650 = vadd.f32 0.0, %v649
    %v651 = vpop.f32.mrf.mxu0
    %v652 = vadd.f32 0.0, %v651
    %653 = vmatmul.bf16.gmra.mxu0 %v374
    %v654 = vpop.f32.mrf.mxu0
    %v655 = vadd.f32 0.0, %v654
    %v656 = vpop.f32.mrf.mxu0
    %v657 = vadd.f32 0.0, %v656
    %658 = vdwg.mxu0
    %v659 = vadd.f32 %v529, %v580
    %v660 = vadd.f32 %v530, %v582
    %v661 = vadd.f32 %v531, %v585
    %v662 = vadd.f32 %v532, %v587
    %v663 = vadd.f32 %v533, %v590
    %v664 = vadd.f32 %v534, %v592
    %v665 = vadd.f32 %v535, %v595
    %v666 = vadd.f32 %v536, %v597
    %v667 = vadd.f32 %v537, %v600
    %v668 = vadd.f32 %v538, %v602
    %v669 = vadd.f32 %v539, %v605
    %v670 = vadd.f32 %v540, %v607
    %v671 = vadd.f32 %v541, %v610
    %v672 = vadd.f32 %v542, %v612
    %v673 = vadd.f32 %v543, %v615
    %v674 = vadd.f32 %v544, %v617
    %v675 = vadd.f32 %v545, %v620
    %v676 = vadd.f32 %v546, %v622
    %v677 = vadd.f32 %v547, %v625
    %v678 = vadd.f32 %v548, %v627
    %v679 = vadd.f32 %v549, %v630
    %v680 = vadd.f32 %v550, %v632
    %v681 = vadd.f32 %v551, %v635
    %v682 = vadd.f32 %v552, %v637
    %v683 = vadd.f32 %v553, %v640
    %v684 = vadd.f32 %v554, %v642
    %v685 = vadd.f32 %v555, %v645
    %v686 = vadd.f32 %v556, %v647
    %v687 = vadd.f32 %v557, %v650
    %v688 = vadd.f32 %v558, %v652
    %v689 = vadd.f32 %v559, %v655
    %v690 = vadd.f32 %v560, %v657
    %691 = vst [vmem:[#allocation2] sm:$0xff] %v659
    %692 = vst [vmem:[#allocation2 + $0x8] sm:$0xff] %v660
    %693 = vst [vmem:[#allocation2 + $0x10] sm:$0xff] %v661
    %694 = vst [vmem:[#allocation2 + $0x18] sm:$0xff] %v662
    %695 = vst [vmem:[#allocation2 + $0x20] sm:$0xff] %v663
    %696 = vst [vmem:[#allocation2 + $0x28] sm:$0xff] %v664
    %697 = vst [vmem:[#allocation2 + $0x30] sm:$0xff] %v665
    %698 = vst [vmem:[#allocation2 + $0x38] sm:$0xff] %v666
    %699 = vst [vmem:[#allocation2 + $0x40] sm:$0xff] %v667
    %700 = vst [vmem:[#allocation2 + $0x48] sm:$0xff] %v668
    %701 = vst [vmem:[#allocation2 + $0x50] sm:$0xff] %v669
    %702 = vst [vmem:[#allocation2 + $0x58] sm:$0xff] %v670
    %703 = vst [vmem:[#allocation2 + $0x60] sm:$0xff] %v671
    %704 = vst [vmem:[#allocation2 + $0x68] sm:$0xff] %v672
    %705 = vst [vmem:[#allocation2 + $0x70] sm:$0xff] %v673
    %706 = vst [vmem:[#allocation2 + $0x78] sm:$0xff] %v674
    %707 = vst [vmem:[#allocation2 + $0x80] sm:$0xff] %v675
    %708 = vst [vmem:[#allocation2 + $0x88] sm:$0xff] %v676
    %709 = vst [vmem:[#allocation2 + $0x90] sm:$0xff] %v677
    %710 = vst [vmem:[#allocation2 + $0x98] sm:$0xff] %v678
    %711 = vst [vmem:[#allocation2 + $0xa0] sm:$0xff] %v679
    %712 = vst [vmem:[#allocation2 + $0xa8] sm:$0xff] %v680
    %713 = vst [vmem:[#allocation2 + $0xb0] sm:$0xff] %v681
    %714 = vst [vmem:[#allocation2 + $0xb8] sm:$0xff] %v682
    %715 = vst [vmem:[#allocation2 + $0xc0] sm:$0xff] %v683
    %716 = vst [vmem:[#allocation2 + $0xc8] sm:$0xff] %v684
    %717 = vst [vmem:[#allocation2 + $0xd0] sm:$0xff] %v685
    %718 = vst [vmem:[#allocation2 + $0xd8] sm:$0xff] %v686
    %719 = vst [vmem:[#allocation2 + $0xe0] sm:$0xff] %v687
    %720 = vst [vmem:[#allocation2 + $0xe8] sm:$0xff] %v688
    %721 = vst [vmem:[#allocation2 + $0xf0] sm:$0xff] %v689
    %722 = vst [vmem:[#allocation2 + $0xf8] sm:$0xff] %v690
    %v723 = vld [vmem:[#allocation2] sm:$0xff]
    %v724 = vld [vmem:[#allocation2 + $0x8] sm:$0xff]
    %v725 = vld [vmem:[#allocation2 + $0x10] sm:$0xff]
    %v726 = vld [vmem:[#allocation2 + $0x18] sm:$0xff]
    %v727 = vld [vmem:[#allocation2 + $0x20] sm:$0xff]
    %v728 = vld [vmem:[#allocation2 + $0x28] sm:$0xff]
    %v729 = vld [vmem:[#allocation2 + $0x30] sm:$0xff]
    %v730 = vld [vmem:[#allocation2 + $0x38] sm:$0xff]
    %v731 = vld [vmem:[#allocation2 + $0x40] sm:$0xff]
    %v732 = vld [vmem:[#allocation2 + $0x48] sm:$0xff]
    %v733 = vld [vmem:[#allocation2 + $0x50] sm:$0xff]
    %v734 = vld [vmem:[#allocation2 + $0x58] sm:$0xff]
    %v735 = vld [vmem:[#allocation2 + $0x60] sm:$0xff]
    %v736 = vld [vmem:[#allocation2 + $0x68] sm:$0xff]
    %v737 = vld [vmem:[#allocation2 + $0x70] sm:$0xff]
    %v738 = vld [vmem:[#allocation2 + $0x78] sm:$0xff]
    %v739 = vld [vmem:[#allocation2 + $0x80] sm:$0xff]
    %v740 = vld [vmem:[#allocation2 + $0x88] sm:$0xff]
    %v741 = vld [vmem:[#allocation2 + $0x90] sm:$0xff]
    %v742 = vld [vmem:[#allocation2 + $0x98] sm:$0xff]
    %v743 = vld [vmem:[#allocation2 + $0xa0] sm:$0xff]
    %v744 = vld [vmem:[#allocation2 + $0xa8] sm:$0xff]
    %v745 = vld [vmem:[#allocation2 + $0xb0] sm:$0xff]
    %v746 = vld [vmem:[#allocation2 + $0xb8] sm:$0xff]
    %v747 = vld [vmem:[#allocation2 + $0xc0] sm:$0xff]
    %v748 = vld [vmem:[#allocation2 + $0xc8] sm:$0xff]
    %v749 = vld [vmem:[#allocation2 + $0xd0] sm:$0xff]
    %v750 = vld [vmem:[#allocation2 + $0xd8] sm:$0xff]
    %v751 = vld [vmem:[#allocation2 + $0xe0] sm:$0xff]
    %v752 = vld [vmem:[#allocation2 + $0xe8] sm:$0xff]
    %v753 = vld [vmem:[#allocation2 + $0xf0] sm:$0xff]
    %v754 = vld [vmem:[#allocation2 + $0xf8] sm:$0xff]
    %s755 = scalar_lea.vmem %s1, 16
    %v756 = vld [vmem:[%s755] sm:$0xf]
    %v757 = vld [vmem:[%s755 + $0x4] sm:$0xf]
    %v760 = vunpack.c.l.b16 %v756
    %v761 = vunpack.c.l.b16 %v757
    %v762 = vpack.c.b16 %v761, %v760
    %764 = vmatpush.bf16.msra.mxu0 0
    %765 = vmatpush.bf16.msra.mxu0 0
    %766 = vmatpush.bf16.msra.mxu0 0
    %767 = vmatpush.bf16.msra.mxu0 0
    %768 = vmatpush.bf16.msra.mxu0 0
    %769 = vmatpush.bf16.msra.mxu0 0
    %770 = vmatpush.bf16.msra.mxu0 0
    %771 = vmatpush.bf16.msra.mxu0 %v762
    %772 = vmatmul.bf16.gmra.mxu0 %v329
    %v773 = vpop.f32.mrf.mxu0
    %v774 = vadd.f32 0.0, %v773
    %v775 = vpop.f32.mrf.mxu0
    %v776 = vadd.f32 0.0, %v775
    %777 = vmatmul.bf16.gmra.mxu0 %v332
    %v778 = vpop.f32.mrf.mxu0
    %v779 = vadd.f32 0.0, %v778
    %v780 = vpop.f32.mrf.mxu0
    %v781 = vadd.f32 0.0, %v780
    %782 = vmatmul.bf16.gmra.mxu0 %v335
    %v783 = vpop.f32.mrf.mxu0
    %v784 = vadd.f32 0.0, %v783
    %v785 = vpop.f32.mrf.mxu0
    %v786 = vadd.f32 0.0, %v785
    %787 = vmatmul.bf16.gmra.mxu0 %v338
    %v788 = vpop.f32.mrf.mxu0
    %v789 = vadd.f32 0.0, %v788
    %v790 = vpop.f32.mrf.mxu0
    %v791 = vadd.f32 0.0, %v790
    %792 = vmatmul.bf16.gmra.mxu0 %v341
    %v793 = vpop.f32.mrf.mxu0
    %v794 = vadd.f32 0.0, %v793
    %v795 = vpop.f32.mrf.mxu0
    %v796 = vadd.f32 0.0, %v795
    %797 = vmatmul.bf16.gmra.mxu0 %v344
    %v798 = vpop.f32.mrf.mxu0
    %v799 = vadd.f32 0.0, %v798
    %v800 = vpop.f32.mrf.mxu0
    %v801 = vadd.f32 0.0, %v800
    %802 = vmatmul.bf16.gmra.mxu0 %v347
    %v803 = vpop.f32.mrf.mxu0
    %v804 = vadd.f32 0.0, %v803
    %v805 = vpop.f32.mrf.mxu0
    %v806 = vadd.f32 0.0, %v805
    %807 = vmatmul.bf16.gmra.mxu0 %v350
    %v808 = vpop.f32.mrf.mxu0
    %v809 = vadd.f32 0.0, %v808
    %v810 = vpop.f32.mrf.mxu0
    %v811 = vadd.f32 0.0, %v810
    %812 = vmatmul.bf16.gmra.mxu0 %v353
    %v813 = vpop.f32.mrf.mxu0
    %v814 = vadd.f32 0.0, %v813
    %v815 = vpop.f32.mrf.mxu0
    %v816 = vadd.f32 0.0, %v815
    %817 = vmatmul.bf16.gmra.mxu0 %v356
    %v818 = vpop.f32.mrf.mxu0
    %v819 = vadd.f32 0.0, %v818
    %v820 = vpop.f32.mrf.mxu0
    %v821 = vadd.f32 0.0, %v820
    %822 = vmatmul.bf16.gmra.mxu0 %v359
    %v823 = vpop.f32.mrf.mxu0
    %v824 = vadd.f32 0.0, %v823
    %v825 = vpop.f32.mrf.mxu0
    %v826 = vadd.f32 0.0, %v825
    %827 = vmatmul.bf16.gmra.mxu0 %v362
    %v828 = vpop.f32.mrf.mxu0
    %v829 = vadd.f32 0.0, %v828
    %v830 = vpop.f32.mrf.mxu0
    %v831 = vadd.f32 0.0, %v830
    %832 = vmatmul.bf16.gmra.mxu0 %v365
    %v833 = vpop.f32.mrf.mxu0
    %v834 = vadd.f32 0.0, %v833
    %v835 = vpop.f32.mrf.mxu0
    %v836 = vadd.f32 0.0, %v835
    %837 = vmatmul.bf16.gmra.mxu0 %v368
    %v838 = vpop.f32.mrf.mxu0
    %v839 = vadd.f32 0.0, %v838
    %v840 = vpop.f32.mrf.mxu0
    %v841 = vadd.f32 0.0, %v840
    %842 = vmatmul.bf16.gmra.mxu0 %v371
    %v843 = vpop.f32.mrf.mxu0
    %v844 = vadd.f32 0.0, %v843
    %v845 = vpop.f32.mrf.mxu0
    %v846 = vadd.f32 0.0, %v845
    %847 = vmatmul.bf16.gmra.mxu0 %v374
    %v848 = vpop.f32.mrf.mxu0
    %v849 = vadd.f32 0.0, %v848
    %v850 = vpop.f32.mrf.mxu0
    %v851 = vadd.f32 0.0, %v850
    %852 = vdwg.mxu0
    %v853 = vadd.f32 %v723, %v774
    %v854 = vadd.f32 %v724, %v776
    %v855 = vadd.f32 %v725, %v779
    %v856 = vadd.f32 %v726, %v781
    %v857 = vadd.f32 %v727, %v784
    %v858 = vadd.f32 %v728, %v786
    %v859 = vadd.f32 %v729, %v789
    %v860 = vadd.f32 %v730, %v791
    %v861 = vadd.f32 %v731, %v794
    %v862 = vadd.f32 %v732, %v796
    %v863 = vadd.f32 %v733, %v799
    %v864 = vadd.f32 %v734, %v801
    %v865 = vadd.f32 %v735, %v804
    %v866 = vadd.f32 %v736, %v806
    %v867 = vadd.f32 %v737, %v809
    %v868 = vadd.f32 %v738, %v811
    %v869 = vadd.f32 %v739, %v814
    %v870 = vadd.f32 %v740, %v816
    %v871 = vadd.f32 %v741, %v819
    %v872 = vadd.f32 %v742, %v821
    %v873 = vadd.f32 %v743, %v824
    %v874 = vadd.f32 %v744, %v826
    %v875 = vadd.f32 %v745, %v829
    %v876 = vadd.f32 %v746, %v831
    %v877 = vadd.f32 %v747, %v834
    %v878 = vadd.f32 %v748, %v836
    %v879 = vadd.f32 %v749, %v839
    %v880 = vadd.f32 %v750, %v841
    %v881 = vadd.f32 %v751, %v844
    %v882 = vadd.f32 %v752, %v846
    %v883 = vadd.f32 %v753, %v849
    %v884 = vadd.f32 %v754, %v851
    %885 = vst [vmem:[#allocation2] sm:$0xff] %v853
    %886 = vst [vmem:[#allocation2 + $0x8] sm:$0xff] %v854
    %887 = vst [vmem:[#allocation2 + $0x10] sm:$0xff] %v855
    %888 = vst [vmem:[#allocation2 + $0x18] sm:$0xff] %v856
    %889 = vst [vmem:[#allocation2 + $0x20] sm:$0xff] %v857
    %890 = vst [vmem:[#allocation2 + $0x28] sm:$0xff] %v858
    %891 = vst [vmem:[#allocation2 + $0x30] sm:$0xff] %v859
    %892 = vst [vmem:[#allocation2 + $0x38] sm:$0xff] %v860
    %893 = vst [vmem:[#allocation2 + $0x40] sm:$0xff] %v861
    %894 = vst [vmem:[#allocation2 + $0x48] sm:$0xff] %v862
    %895 = vst [vmem:[#allocation2 + $0x50] sm:$0xff] %v863
    %896 = vst [vmem:[#allocation2 + $0x58] sm:$0xff] %v864
    %897 = vst [vmem:[#allocation2 + $0x60] sm:$0xff] %v865
    %898 = vst [vmem:[#allocation2 + $0x68] sm:$0xff] %v866
    %899 = vst [vmem:[#allocation2 + $0x70] sm:$0xff] %v867
    %900 = vst [vmem:[#allocation2 + $0x78] sm:$0xff] %v868
    %901 = vst [vmem:[#allocation2 + $0x80] sm:$0xff] %v869
    %902 = vst [vmem:[#allocation2 + $0x88] sm:$0xff] %v870
    %903 = vst [vmem:[#allocation2 + $0x90] sm:$0xff] %v871
    %904 = vst [vmem:[#allocation2 + $0x98] sm:$0xff] %v872
    %905 = vst [vmem:[#allocation2 + $0xa0] sm:$0xff] %v873
    %906 = vst [vmem:[#allocation2 + $0xa8] sm:$0xff] %v874
    %907 = vst [vmem:[#allocation2 + $0xb0] sm:$0xff] %v875
    %908 = vst [vmem:[#allocation2 + $0xb8] sm:$0xff] %v876
    %909 = vst [vmem:[#allocation2 + $0xc0] sm:$0xff] %v877
    %910 = vst [vmem:[#allocation2 + $0xc8] sm:$0xff] %v878
    %911 = vst [vmem:[#allocation2 + $0xd0] sm:$0xff] %v879
    %912 = vst [vmem:[#allocation2 + $0xd8] sm:$0xff] %v880
    %913 = vst [vmem:[#allocation2 + $0xe0] sm:$0xff] %v881
    %914 = vst [vmem:[#allocation2 + $0xe8] sm:$0xff] %v882
    %915 = vst [vmem:[#allocation2 + $0xf0] sm:$0xff] %v883
    %916 = vst [vmem:[#allocation2 + $0xf8] sm:$0xff] %v884
    %v917 = vld [vmem:[#allocation2] sm:$0xff]
    %v918 = vld [vmem:[#allocation2 + $0x8] sm:$0xff]
    %v919 = vld [vmem:[#allocation2 + $0x10] sm:$0xff]
    %v920 = vld [vmem:[#allocation2 + $0x18] sm:$0xff]
    %v921 = vld [vmem:[#allocation2 + $0x20] sm:$0xff]
    %v922 = vld [vmem:[#allocation2 + $0x28] sm:$0xff]
    %v923 = vld [vmem:[#allocation2 + $0x30] sm:$0xff]
    %v924 = vld [vmem:[#allocation2 + $0x38] sm:$0xff]
    %v925 = vld [vmem:[#allocation2 + $0x40] sm:$0xff]
    %v926 = vld [vmem:[#allocation2 + $0x48] sm:$0xff]
    %v927 = vld [vmem:[#allocation2 + $0x50] sm:$0xff]
    %v928 = vld [vmem:[#allocation2 + $0x58] sm:$0xff]
    %v929 = vld [vmem:[#allocation2 + $0x60] sm:$0xff]
    %v930 = vld [vmem:[#allocation2 + $0x68] sm:$0xff]
    %v931 = vld [vmem:[#allocation2 + $0x70] sm:$0xff]
    %v932 = vld [vmem:[#allocation2 + $0x78] sm:$0xff]
    %v933 = vld [vmem:[#allocation2 + $0x80] sm:$0xff]
    %v934 = vld [vmem:[#allocation2 + $0x88] sm:$0xff]
    %v935 = vld [vmem:[#allocation2 + $0x90] sm:$0xff]
    %v936 = vld [vmem:[#allocation2 + $0x98] sm:$0xff]
    %v937 = vld [vmem:[#allocation2 + $0xa0] sm:$0xff]
    %v938 = vld [vmem:[#allocation2 + $0xa8] sm:$0xff]
    %v939 = vld [vmem:[#allocation2 + $0xb0] sm:$0xff]
    %v940 = vld [vmem:[#allocation2 + $0xb8] sm:$0xff]
    %v941 = vld [vmem:[#allocation2 + $0xc0] sm:$0xff]
    %v942 = vld [vmem:[#allocation2 + $0xc8] sm:$0xff]
    %v943 = vld [vmem:[#allocation2 + $0xd0] sm:$0xff]
    %v944 = vld [vmem:[#allocation2 + $0xd8] sm:$0xff]
    %v945 = vld [vmem:[#allocation2 + $0xe0] sm:$0xff]
    %v946 = vld [vmem:[#allocation2 + $0xe8] sm:$0xff]
    %v947 = vld [vmem:[#allocation2 + $0xf0] sm:$0xff]
    %v948 = vld [vmem:[#allocation2 + $0xf8] sm:$0xff]
    %949 = vst [vmem:[#allocation3] sm:$0xff] %v917
    %950 = vst [vmem:[#allocation3 + $0x8] sm:$0xff] %v918
    %951 = vst [vmem:[#allocation3 + $0x10] sm:$0xff] %v919
    %952 = vst [vmem:[#allocation3 + $0x18] sm:$0xff] %v920
    %953 = vst [vmem:[#allocation3 + $0x20] sm:$0xff] %v921
    %954 = vst [vmem:[#allocation3 + $0x28] sm:$0xff] %v922
    %955 = vst [vmem:[#allocation3 + $0x30] sm:$0xff] %v923
    %956 = vst [vmem:[#allocation3 + $0x38] sm:$0xff] %v924
    %957 = vst [vmem:[#allocation3 + $0x40] sm:$0xff] %v925
    %958 = vst [vmem:[#allocation3 + $0x48] sm:$0xff] %v926
    %959 = vst [vmem:[#allocation3 + $0x50] sm:$0xff] %v927
    %960 = vst [vmem:[#allocation3 + $0x58] sm:$0xff] %v928
    %961 = vst [vmem:[#allocation3 + $0x60] sm:$0xff] %v929
    %962 = vst [vmem:[#allocation3 + $0x68] sm:$0xff] %v930
    %963 = vst [vmem:[#allocation3 + $0x70] sm:$0xff] %v931
    %964 = vst [vmem:[#allocation3 + $0x78] sm:$0xff] %v932
    %965 = vst [vmem:[#allocation3 + $0x80] sm:$0xff] %v933
    %966 = vst [vmem:[#allocation3 + $0x88] sm:$0xff] %v934
    %967 = vst [vmem:[#allocation3 + $0x90] sm:$0xff] %v935
    %968 = vst [vmem:[#allocation3 + $0x98] sm:$0xff] %v936
    %969 = vst [vmem:[#allocation3 + $0xa0] sm:$0xff] %v937
    %970 = vst [vmem:[#allocation3 + $0xa8] sm:$0xff] %v938
    %971 = vst [vmem:[#allocation3 + $0xb0] sm:$0xff] %v939
    %972 = vst [vmem:[#allocation3 + $0xb8] sm:$0xff] %v940
    %973 = vst [vmem:[#allocation3 + $0xc0] sm:$0xff] %v941
    %974 = vst [vmem:[#allocation3 + $0xc8] sm:$0xff] %v942
    %975 = vst [vmem:[#allocation3 + $0xd0] sm:$0xff] %v943
    %976 = vst [vmem:[#allocation3 + $0xd8] sm:$0xff] %v944
    %977 = vst [vmem:[#allocation3 + $0xe0] sm:$0xff] %v945
    %978 = vst [vmem:[#allocation3 + $0xe8] sm:$0xff] %v946
    %979 = vst [vmem:[#allocation3 + $0xf0] sm:$0xff] %v947
    %980 = vst [vmem:[#allocation3 + $0xf8] sm:$0xff] %v948
    // Predicated region
    $region10: #{tpu_custom_call.1} parent=1 // pred_check
      _
    $region11: #{tpu_custom_call.1} parent=1 // pred_check_branch
      %982 = sbr.rel (0) target = $region13
    $region12: #{tpu_custom_call.1} parent=1 // pred_region
      %984 = vsyncadd [#allocation4], 0
      %s985 = sshll.u32 [#allocation3], 4
      %s986 = int_to_ptr.vmem [resolvable:$true] %s985
      %s987 = sshll.u32 %s2, 4
      %s988 = int_to_ptr.hbm [resolvable:$true] %s987
      %993 = dma.vmem_to_hbm [thread:$0]  %s986, 4096, %s988, [#allocation4], 128, 128, 8
    $region13: #{tpu_custom_call.1} parent=1 // pred_fallthru
      _
    // Predicated region
    $region14: #{tpu_custom_call.1} parent=1 // pred_check
      _
    $region15: #{tpu_custom_call.1} parent=1 // pred_check_branch
      %995 = sbr.rel (0) target = $region17
    $region16: #{tpu_custom_call.1} parent=1 // pred_region
      %997 = dma.done [#allocation4], 4096
    $region17: #{tpu_custom_call.1} parent=1 // pred_fallthru
      _
    %998 = vsyncpa [#allocation4], 1

// kernel: tpu_custom_call.1
$region0: #{tpu_custom_call.1}
  #allocation0 [shape = 'u32[]', space=smem, size = 0x4, offset = 0x4, fixed_abs, tag = 'smem constant byte address 0x4 - core index']
  #allocation1 [shape = 'u32[72,128]{1,0:T(1,128)}', space=vmem, size = 0x9000, scoped, tag = 'internal scratch']
  #allocation2 [shape = 'f32[256,128]{1,0:T(8,128)}', space=vmem, size = 0x20000, scoped, tag = 'scratch operand']
  %s0 = inlined_call_operand.vmem [shape: s32[256,1], index: 0, kind: input, shape index: {}]
  %s1 = inlined_call_operand.vmem [shape: bf16[3,16,128], index: 1, kind: input, shape index: {}]
  %s2 = inlined_call_operand.hbm [shape: f32[256,128], index: 2, kind: output, shape index: {}]
  %s3 = sld [smem:[#allocation0]]
  $region18: #{tpu_custom_call.1} parent=0
    _
  %s5 = ssub.s32 1, %s3
  %s6 = scalar_select 0, %s5, %s3
  $region1: #{tpu_custom_call.1} parent=0
    #allocation3 [shape = 'u8[131072]{0}', space=vmem, size = 0x20000, scoped, tag = 'output window, operand 0, single buffered']
    #allocation4 [shape = 's32[1]{0}', space=sflag, size = 0x4, scoped, tag = 'scoped memory for tpu_custom_call.1']
    %7 = vsyncpa [#allocation4], 0
    // Predicated region
    $region2: #{tpu_custom_call.1} parent=1 // pred_check
      _
    $region3: #{tpu_custom_call.1} parent=1 // pred_check_branch
      %9 = sbr.rel (0) target = $region5
    $region4: #{tpu_custom_call.1} parent=1 // pred_region
      _
    $region5: #{tpu_custom_call.1} parent=1 // pred_fallthru
      _
    // Predicated region
    $region6: #{tpu_custom_call.1} parent=1 // pred_check
      _
    $region7: #{tpu_custom_call.1} parent=1 // pred_check_branch
      %11 = sbr.rel (0) target = $region9
    $region8: #{tpu_custom_call.1} parent=1 // pred_region
      _
    $region9: #{tpu_custom_call.1} parent=1 // pred_fallthru
      _
    %v13 = vld [vmem:[%s0] sm:$0xff]
    %v14 = vld [vmem:[%s0 + $0x8] sm:$0xff]
    %v15 = vld [vmem:[%s0 + $0x10] sm:$0xff]
    %v16 = vld [vmem:[%s0 + $0x18] sm:$0xff]
    %v17 = vld [vmem:[%s0 + $0x20] sm:$0xff]
    %v18 = vld [vmem:[%s0 + $0x28] sm:$0xff]
    %v19 = vld [vmem:[%s0 + $0x30] sm:$0xff]
    %v20 = vld [vmem:[%s0 + $0x38] sm:$0xff]
    %v21 = vld [vmem:[%s0 + $0x40] sm:$0xff]
    %v22 = vld [vmem:[%s0 + $0x48] sm:$0xff]
    %v23 = vld [vmem:[%s0 + $0x50] sm:$0xff]
    %v24 = vld [vmem:[%s0 + $0x58] sm:$0xff]
    %v25 = vld [vmem:[%s0 + $0x60] sm:$0xff]
    %v26 = vld [vmem:[%s0 + $0x68] sm:$0xff]
    %v27 = vld [vmem:[%s0 + $0x70] sm:$0xff]
    %v28 = vld [vmem:[%s0 + $0x78] sm:$0xff]
    %v29 = vld [vmem:[%s0 + $0x80] sm:$0xff]
    %v30 = vld [vmem:[%s0 + $0x88] sm:$0xff]
    %v31 = vld [vmem:[%s0 + $0x90] sm:$0xff]
    %v32 = vld [vmem:[%s0 + $0x98] sm:$0xff]
    %v33 = vld [vmem:[%s0 + $0xa0] sm:$0xff]
    %v34 = vld [vmem:[%s0 + $0xa8] sm:$0xff]
    %v35 = vld [vmem:[%s0 + $0xb0] sm:$0xff]
    %v36 = vld [vmem:[%s0 + $0xb8] sm:$0xff]
    %v37 = vld [vmem:[%s0 + $0xc0] sm:$0xff]
    %v38 = vld [vmem:[%s0 + $0xc8] sm:$0xff]
    %v39 = vld [vmem:[%s0 + $0xd0] sm:$0xff]
    %v40 = vld [vmem:[%s0 + $0xd8] sm:$0xff]
    %v41 = vld [vmem:[%s0 + $0xe0] sm:$0xff]
    %v42 = vld [vmem:[%s0 + $0xe8] sm:$0xff]
    %v43 = vld [vmem:[%s0 + $0xf0] sm:$0xff]
    %v44 = vld [vmem:[%s0 + $0xf8] sm:$0xff]
    %v45 = vlaneseq
    %v46 = vand.u32 %v45, 127
    %47 = vst [vmem:[#allocation2] sm:$0xff] 0.0
    %48 = vst [vmem:[#allocation2 + $0x8] sm:$0xff] 0.0
    %49 = vst [vmem:[#allocation2 + $0x10] sm:$0xff] 0.0
    %50 = vst [vmem:[#allocation2 + $0x18] sm:$0xff] 0.0
    %51 = vst [vmem:[#allocation2 + $0x20] sm:$0xff] 0.0
    %52 = vst [vmem:[#allocation2 + $0x28] sm:$0xff] 0.0
    %53 = vst [vmem:[#allocation2 + $0x30] sm:$0xff] 0.0
    %54 = vst [vmem:[#allocation2 + $0x38] sm:$0xff] 0.0
    %55 = vst [vmem:[#allocation2 + $0x40] sm:$0xff] 0.0
    %56 = vst [vmem:[#allocation2 + $0x48] sm:$0xff] 0.0
    %57 = vst [vmem:[#allocation2 + $0x50] sm:$0xff] 0.0
    %58 = vst [vmem:[#allocation2 + $0x58] sm:$0xff] 0.0
    %59 = vst [vmem:[#allocation2 + $0x60] sm:$0xff] 0.0
    %60 = vst [vmem:[#allocation2 + $0x68] sm:$0xff] 0.0
    %61 = vst [vmem:[#allocation2 + $0x70] sm:$0xff] 0.0
    %62 = vst [vmem:[#allocation2 + $0x78] sm:$0xff] 0.0
    %63 = vst [vmem:[#allocation2 + $0x80] sm:$0xff] 0.0
    %64 = vst [vmem:[#allocation2 + $0x88] sm:$0xff] 0.0
    %65 = vst [vmem:[#allocation2 + $0x90] sm:$0xff] 0.0
    %66 = vst [vmem:[#allocation2 + $0x98] sm:$0xff] 0.0
    %67 = vst [vmem:[#allocation2 + $0xa0] sm:$0xff] 0.0
    %68 = vst [vmem:[#allocation2 + $0xa8] sm:$0xff] 0.0
    %69 = vst [vmem:[#allocation2 + $0xb0] sm:$0xff] 0.0
    %70 = vst [vmem:[#allocation2 + $0xb8] sm:$0xff] 0.0
    %71 = vst [vmem:[#allocation2 + $0xc0] sm:$0xff] 0.0
    %72 = vst [vmem:[#allocation2 + $0xc8] sm:$0xff] 0.0
    %73 = vst [vmem:[#allocation2 + $0xd0] sm:$0xff] 0.0
    %74 = vst [vmem:[#allocation2 + $0xd8] sm:$0xff] 0.0
    %75 = vst [vmem:[#allocation2 + $0xe0] sm:$0xff] 0.0
    %76 = vst [vmem:[#allocation2 + $0xe8] sm:$0xff] 0.0
    %77 = vst [vmem:[#allocation2 + $0xf0] sm:$0xff] 0.0
    %78 = vst [vmem:[#allocation2 + $0xf8] sm:$0xff] 0.0
    %79 = vset.pattern.permute.xlu0 0
    %80 = vperm.xlu0 %79, %v13
    %v81 = vpop.permute.xlu0 %80
    %82 = vset.pattern.permute.xlu0 0
    %83 = vperm.xlu0 %82, %v14
    %v84 = vpop.permute.xlu0 %83
    %85 = vset.pattern.permute.xlu0 0
    %86 = vperm.xlu0 %85, %v15
    %v87 = vpop.permute.xlu0 %86
    %88 = vset.pattern.permute.xlu0 0
    %89 = vperm.xlu0 %88, %v16
    %v90 = vpop.permute.xlu0 %89
    %91 = vset.pattern.permute.xlu0 0
    %92 = vperm.xlu0 %91, %v17
    %v93 = vpop.permute.xlu0 %92
    %94 = vset.pattern.permute.xlu0 0
    %95 = vperm.xlu0 %94, %v18
    %v96 = vpop.permute.xlu0 %95
    %97 = vset.pattern.permute.xlu0 0
    %98 = vperm.xlu0 %97, %v19
    %v99 = vpop.permute.xlu0 %98
    %100 = vset.pattern.permute.xlu0 0
    %101 = vperm.xlu0 %100, %v20
    %v102 = vpop.permute.xlu0 %101
    %103 = vset.pattern.permute.xlu0 0
    %104 = vperm.xlu0 %103, %v21
    %v105 = vpop.permute.xlu0 %104
    %106 = vset.pattern.permute.xlu0 0
    %107 = vperm.xlu0 %106, %v22
    %v108 = vpop.permute.xlu0 %107
    %109 = vset.pattern.permute.xlu0 0
    %110 = vperm.xlu0 %109, %v23
    %v111 = vpop.permute.xlu0 %110
    %112 = vset.pattern.permute.xlu0 0
    %113 = vperm.xlu0 %112, %v24
    %v114 = vpop.permute.xlu0 %113
    %115 = vset.pattern.permute.xlu0 0
    %116 = vperm.xlu0 %115, %v25
    %v117 = vpop.permute.xlu0 %116
    %118 = vset.pattern.permute.xlu0 0
    %119 = vperm.xlu0 %118, %v26
    %v120 = vpop.permute.xlu0 %119
    %121 = vset.pattern.permute.xlu0 0
    %122 = vperm.xlu0 %121, %v27
    %v123 = vpop.permute.xlu0 %122
    %124 = vset.pattern.permute.xlu0 0
    %125 = vperm.xlu0 %124, %v28
    %v126 = vpop.permute.xlu0 %125
    %127 = vset.pattern.permute.xlu0 0
    %128 = vperm.xlu0 %127, %v29
    %v129 = vpop.permute.xlu0 %128
    %130 = vset.pattern.permute.xlu0 0
    %131 = vperm.xlu0 %130, %v30
    %v132 = vpop.permute.xlu0 %131
    %133 = vset.pattern.permute.xlu0 0
    %134 = vperm.xlu0 %133, %v31
    %v135 = vpop.permute.xlu0 %134
    %136 = vset.pattern.permute.xlu0 0
    %137 = vperm.xlu0 %136, %v32
    %v138 = vpop.permute.xlu0 %137
    %139 = vset.pattern.permute.xlu0 0
    %140 = vperm.xlu0 %139, %v33
    %v141 = vpop.permute.xlu0 %140
    %142 = vset.pattern.permute.xlu0 0
    %143 = vperm.xlu0 %142, %v34
    %v144 = vpop.permute.xlu0 %143
    %145 = vset.pattern.permute.xlu0 0
    %146 = vperm.xlu0 %145, %v35
    %v147 = vpop.permute.xlu0 %146
    %148 = vset.pattern.permute.xlu0 0
    %149 = vperm.xlu0 %148, %v36
    %v150 = vpop.permute.xlu0 %149
    %151 = vset.pattern.permute.xlu0 0
    %152 = vperm.xlu0 %151, %v37
    %v153 = vpop.permute.xlu0 %152
    %154 = vset.pattern.permute.xlu0 0
    %155 = vperm.xlu0 %154, %v38
    %v156 = vpop.permute.xlu0 %155
    %157 = vset.pattern.permute.xlu0 0
    %158 = vperm.xlu0 %157, %v39
    %v159 = vpop.permute.xlu0 %158
    %160 = vset.pattern.permute.xlu0 0
    %161 = vperm.xlu0 %160, %v40
    %v162 = vpop.permute.xlu0 %161
    %163 = vset.pattern.permute.xlu0 0
    %164 = vperm.xlu0 %163, %v41
    %v165 = vpop.permute.xlu0 %164
    %166 = vset.pattern.permute.xlu0 0
    %167 = vperm.xlu0 %166, %v42
    %v168 = vpop.permute.xlu0 %167
    %169 = vset.pattern.permute.xlu0 0
    %170 = vperm.xlu0 %169, %v43
    %v171 = vpop.permute.xlu0 %170
    %172 = vset.pattern.permute.xlu0 0
    %173 = vperm.xlu0 %172, %v44
    %v174 = vpop.permute.xlu0 %173
    %vm175 = vcmp.eq.s32.totalorder %v81, %v46
    %vm176 = vcmp.eq.s32.totalorder %v84, %v46
    %vm177 = vcmp.eq.s32.totalorder %v87, %v46
    %vm178 = vcmp.eq.s32.totalorder %v90, %v46
    %vm179 = vcmp.eq.s32.totalorder %v93, %v46
    %vm180 = vcmp.eq.s32.totalorder %v96, %v46
    %vm181 = vcmp.eq.s32.totalorder %v99, %v46
    %vm182 = vcmp.eq.s32.totalorder %v102, %v46
    %vm183 = vcmp.eq.s32.totalorder %v105, %v46
    %vm184 = vcmp.eq.s32.totalorder %v108, %v46
    %vm185 = vcmp.eq.s32.totalorder %v111, %v46
    %vm186 = vcmp.eq.s32.totalorder %v114, %v46
    %vm187 = vcmp.eq.s32.totalorder %v117, %v46
    %vm188 = vcmp.eq.s32.totalorder %v120, %v46
    %vm189 = vcmp.eq.s32.totalorder %v123, %v46
    %vm190 = vcmp.eq.s32.totalorder %v126, %v46
    %vm191 = vcmp.eq.s32.totalorder %v129, %v46
    %vm192 = vcmp.eq.s32.totalorder %v132, %v46
    %vm193 = vcmp.eq.s32.totalorder %v135, %v46
    %vm194 = vcmp.eq.s32.totalorder %v138, %v46
    %vm195 = vcmp.eq.s32.totalorder %v141, %v46
    %vm196 = vcmp.eq.s32.totalorder %v144, %v46
    %vm197 = vcmp.eq.s32.totalorder %v147, %v46
    %vm198 = vcmp.eq.s32.totalorder %v150, %v46
    %vm199 = vcmp.eq.s32.totalorder %v153, %v46
    %vm200 = vcmp.eq.s32.totalorder %v156, %v46
    %vm201 = vcmp.eq.s32.totalorder %v159, %v46
    %vm202 = vcmp.eq.s32.totalorder %v162, %v46
    %vm203 = vcmp.eq.s32.totalorder %v165, %v46
    %vm204 = vcmp.eq.s32.totalorder %v168, %v46
    %vm205 = vcmp.eq.s32.totalorder %v171, %v46
    %vm206 = vcmp.eq.s32.totalorder %v174, %v46
    %v207 = vsel %vm175, 1, 0
    %v208 = vsel %vm176, 1, 0
    %v209 = vsel %vm177, 1, 0
    %v210 = vsel %vm178, 1, 0
    %v211 = vsel %vm179, 1, 0
    %v212 = vsel %vm180, 1, 0
    %v213 = vsel %vm181, 1, 0
    %v214 = vsel %vm182, 1, 0
    %v215 = vsel %vm183, 1, 0
    %v216 = vsel %vm184, 1, 0
    %v217 = vsel %vm185, 1, 0
    %v218 = vsel %vm186, 1, 0
    %v219 = vsel %vm187, 1, 0
    %v220 = vsel %vm188, 1, 0
    %v221 = vsel %vm189, 1, 0
    %v222 = vsel %vm190, 1, 0
    %v223 = vsel %vm191, 1, 0
    %v224 = vsel %vm192, 1, 0
    %v225 = vsel %vm193, 1, 0
    %v226 = vsel %vm194, 1, 0
    %v227 = vsel %vm195, 1, 0
    %v228 = vsel %vm196, 1, 0
    %v229 = vsel %vm197, 1, 0
    %v230 = vsel %vm198, 1, 0
    %v231 = vsel %vm199, 1, 0
    %v232 = vsel %vm200, 1, 0
    %v233 = vsel %vm201, 1, 0
    %v234 = vsel %vm202, 1, 0
    %v235 = vsel %vm203, 1, 0
    %v236 = vsel %vm204, 1, 0
    %v237 = vsel %vm205, 1, 0
    %v238 = vsel %vm206, 1, 0
    %v239 = vcvt.s32.f32 %v207
    %v240 = vcvt.s32.f32 %v208
    %v241 = vcvt.s32.f32 %v209
    %v242 = vcvt.s32.f32 %v210
    %v243 = vcvt.s32.f32 %v211
    %v244 = vcvt.s32.f32 %v212
    %v245 = vcvt.s32.f32 %v213
    %v246 = vcvt.s32.f32 %v214
    %v247 = vcvt.s32.f32 %v215
    %v248 = vcvt.s32.f32 %v216
    %v249 = vcvt.s32.f32 %v217
    %v250 = vcvt.s32.f32 %v218
    %v251 = vcvt.s32.f32 %v219
    %v252 = vcvt.s32.f32 %v220
    %v253 = vcvt.s32.f32 %v221
    %v254 = vcvt.s32.f32 %v222
    %v255 = vcvt.s32.f32 %v223
    %v256 = vcvt.s32.f32 %v224
    %v257 = vcvt.s32.f32 %v225
    %v258 = vcvt.s32.f32 %v226
    %v259 = vcvt.s32.f32 %v227
    %v260 = vcvt.s32.f32 %v228
    %v261 = vcvt.s32.f32 %v229
    %v262 = vcvt.s32.f32 %v230
    %v263 = vcvt.s32.f32 %v231
    %v264 = vcvt.s32.f32 %v232
    %v265 = vcvt.s32.f32 %v233
    %v266 = vcvt.s32.f32 %v234
    %v267 = vcvt.s32.f32 %v235
    %v268 = vcvt.s32.f32 %v236
    %v269 = vcvt.s32.f32 %v237
    %v270 = vcvt.s32.f32 %v238
    %v271 = vpack.c.bf16 %v240, %v239
    %v272 = vpack.c.bf16 %v242, %v241
    %v273 = vpack.c.bf16 %v244, %v243
    %v274 = vpack.c.bf16 %v246, %v245
    %v275 = vpack.c.bf16 %v248, %v247
    %v276 = vpack.c.bf16 %v250, %v249
    %v277 = vpack.c.bf16 %v252, %v251
    %v278 = vpack.c.bf16 %v254, %v253
    %v279 = vpack.c.bf16 %v256, %v255
    %v280 = vpack.c.bf16 %v258, %v257
    %v281 = vpack.c.bf16 %v260, %v259
    %v282 = vpack.c.bf16 %v262, %v261
    %v283 = vpack.c.bf16 %v264, %v263
    %v284 = vpack.c.bf16 %v266, %v265
    %v285 = vpack.c.bf16 %v268, %v267
    %v286 = vpack.c.bf16 %v270, %v269
    %v287 = vld [vmem:[#allocation2] sm:$0xff]
    %v288 = vld [vmem:[#allocation2 + $0x8] sm:$0xff]
    %v289 = vld [vmem:[#allocation2 + $0x10] sm:$0xff]
    %v290 = vld [vmem:[#allocation2 + $0x18] sm:$0xff]
    %v291 = vld [vmem:[#allocation2 + $0x20] sm:$0xff]
    %v292 = vld [vmem:[#allocation2 + $0x28] sm:$0xff]
    %v293 = vld [vmem:[#allocation2 + $0x30] sm:$0xff]
    %v294 = vld [vmem:[#allocation2 + $0x38] sm:$0xff]
    %v295 = vld [vmem:[#allocation2 + $0x40] sm:$0xff]
    %v296 = vld [vmem:[#allocation2 + $0x48] sm:$0xff]
    %v297 = vld [vmem:[#allocation2 + $0x50] sm:$0xff]
    %v298 = vld [vmem:[#allocation2 + $0x58] sm:$0xff]
    %v299 = vld [vmem:[#allocation2 + $0x60] sm:$0xff]
    %v300 = vld [vmem:[#allocation2 + $0x68] sm:$0xff]
    %v301 = vld [vmem:[#allocation2 + $0x70] sm:$0xff]
    %v302 = vld [vmem:[#allocation2 + $0x78] sm:$0xff]
    %v303 = vld [vmem:[#allocation2 + $0x80] sm:$0xff]
    %v304 = vld [vmem:[#allocation2 + $0x88] sm:$0xff]
    %v305 = vld [vmem:[#allocation2 + $0x90] sm:$0xff]
    %v306 = vld [vmem:[#allocation2 + $0x98] sm:$0xff]
    %v307 = vld [vmem:[#allocation2 + $0xa0] sm:$0xff]
    %v308 = vld [vmem:[#allocation2 + $0xa8] sm:$0xff]
    %v309 = vld [vmem:[#allocation2 + $0xb0] sm:$0xff]
    %v310 = vld [vmem:[#allocation2 + $0xb8] sm:$0xff]
    %v311 = vld [vmem:[#allocation2 + $0xc0] sm:$0xff]
    %v312 = vld [vmem:[#allocation2 + $0xc8] sm:$0xff]
    %v313 = vld [vmem:[#allocation2 + $0xd0] sm:$0xff]
    %v314 = vld [vmem:[#allocation2 + $0xd8] sm:$0xff]
    %v315 = vld [vmem:[#allocation2 + $0xe0] sm:$0xff]
    %v316 = vld [vmem:[#allocation2 + $0xe8] sm:$0xff]
    %v317 = vld [vmem:[#allocation2 + $0xf0] sm:$0xff]
    %v318 = vld [vmem:[#allocation2 + $0xf8] sm:$0xff]
    %v319 = vld [vmem:[%s1] sm:$0xf]
    %v320 = vld [vmem:[%s1 + $0x4] sm:$0xf]
    %v323 = vunpack.c.l.b16 %v319
    %v324 = vunpack.c.l.b16 %v320
    %v325 = vpack.c.b16 %v324, %v323
    %vm327 = vcmask 130048
    %v329 = vsel %vm327, %v271, 0
    %v332 = vsel %vm327, %v272, 0
    %v335 = vsel %vm327, %v273, 0
    %v338 = vsel %vm327, %v274, 0
    %v341 = vsel %vm327, %v275, 0
    %v344 = vsel %vm327, %v276, 0
    %v347 = vsel %vm327, %v277, 0
    %v350 = vsel %vm327, %v278, 0
    %v353 = vsel %vm327, %v279, 0
    %v356 = vsel %vm327, %v280, 0
    %v359 = vsel %vm327, %v281, 0
    %v362 = vsel %vm327, %v282, 0
    %v365 = vsel %vm327, %v283, 0
    %v368 = vsel %vm327, %v284, 0
    %v371 = vsel %vm327, %v285, 0
    %v374 = vsel %vm327, %v286, 0
    %376 = vmatpush.bf16.msra.mxu0 0
    %377 = vmatpush.bf16.msra.mxu0 0
    %378 = vmatpush.bf16.msra.mxu0 0
    %379 = vmatpush.bf16.msra.mxu0 0
    %380 = vmatpush.bf16.msra.mxu0 0
    %381 = vmatpush.bf16.msra.mxu0 0
    %382 = vmatpush.bf16.msra.mxu0 0
    %383 = vmatpush.bf16.msra.mxu0 %v325
    %384 = vmatmul.bf16.gmra.mxu0 %v329
    %v385 = vpop.f32.mrf.mxu0
    %v386 = vadd.f32 0.0, %v385
    %v387 = vpop.f32.mrf.mxu0
    %v388 = vadd.f32 0.0, %v387
    %389 = vmatmul.bf16.gmra.mxu0 %v332
    %v390 = vpop.f32.mrf.mxu0
    %v391 = vadd.f32 0.0, %v390
    %v392 = vpop.f32.mrf.mxu0
    %v393 = vadd.f32 0.0, %v392
    %394 = vmatmul.bf16.gmra.mxu0 %v335
    %v395 = vpop.f32.mrf.mxu0
    %v396 = vadd.f32 0.0, %v395
    %v397 = vpop.f32.mrf.mxu0
    %v398 = vadd.f32 0.0, %v397
    %399 = vmatmul.bf16.gmra.mxu0 %v338
    %v400 = vpop.f32.mrf.mxu0
    %v401 = vadd.f32 0.0, %v400
    %v402 = vpop.f32.mrf.mxu0
    %v403 = vadd.f32 0.0, %v402
    %404 = vmatmul.bf16.gmra.mxu0 %v341
    %v405 = vpop.f32.mrf.mxu0
    %v406 = vadd.f32 0.0, %v405
    %v407 = vpop.f32.mrf.mxu0
    %v408 = vadd.f32 0.0, %v407
    %409 = vmatmul.bf16.gmra.mxu0 %v344
    %v410 = vpop.f32.mrf.mxu0
    %v411 = vadd.f32 0.0, %v410
    %v412 = vpop.f32.mrf.mxu0
    %v413 = vadd.f32 0.0, %v412
    %414 = vmatmul.bf16.gmra.mxu0 %v347
    %v415 = vpop.f32.mrf.mxu0
    %v416 = vadd.f32 0.0, %v415
    %v417 = vpop.f32.mrf.mxu0
    %v418 = vadd.f32 0.0, %v417
    %419 = vmatmul.bf16.gmra.mxu0 %v350
    %v420 = vpop.f32.mrf.mxu0
    %v421 = vadd.f32 0.0, %v420
    %v422 = vpop.f32.mrf.mxu0
    %v423 = vadd.f32 0.0, %v422
    %424 = vmatmul.bf16.gmra.mxu0 %v353
    %v425 = vpop.f32.mrf.mxu0
    %v426 = vadd.f32 0.0, %v425
    %v427 = vpop.f32.mrf.mxu0
    %v428 = vadd.f32 0.0, %v427
    %429 = vmatmul.bf16.gmra.mxu0 %v356
    %v430 = vpop.f32.mrf.mxu0
    %v431 = vadd.f32 0.0, %v430
    %v432 = vpop.f32.mrf.mxu0
    %v433 = vadd.f32 0.0, %v432
    %434 = vmatmul.bf16.gmra.mxu0 %v359
    %v435 = vpop.f32.mrf.mxu0
    %v436 = vadd.f32 0.0, %v435
    %v437 = vpop.f32.mrf.mxu0
    %v438 = vadd.f32 0.0, %v437
    %439 = vmatmul.bf16.gmra.mxu0 %v362
    %v440 = vpop.f32.mrf.mxu0
    %v441 = vadd.f32 0.0, %v440
    %v442 = vpop.f32.mrf.mxu0
    %v443 = vadd.f32 0.0, %v442
    %444 = vmatmul.bf16.gmra.mxu0 %v365
    %v445 = vpop.f32.mrf.mxu0
    %v446 = vadd.f32 0.0, %v445
    %v447 = vpop.f32.mrf.mxu0
    %v448 = vadd.f32 0.0, %v447
    %449 = vmatmul.bf16.gmra.mxu0 %v368
    %v450 = vpop.f32.mrf.mxu0
    %v451 = vadd.f32 0.0, %v450
    %v452 = vpop.f32.mrf.mxu0
    %v453 = vadd.f32 0.0, %v452
    %454 = vmatmul.bf16.gmra.mxu0 %v371
    %v455 = vpop.f32.mrf.mxu0
    %v456 = vadd.f32 0.0, %v455
    %v457 = vpop.f32.mrf.mxu0
    %v458 = vadd.f32 0.0, %v457
    %459 = vmatmul.bf16.gmra.mxu0 %v374
    %v460 = vpop.f32.mrf.mxu0
    %v461 = vadd.f32 0.0, %v460
    %v462 = vpop.f32.mrf.mxu0
    %v463 = vadd.f32 0.0, %v462
    %464 = vdwg.mxu0
    %v465 = vadd.f32 %v287, %v386
    %v466 = vadd.f32 %v288, %v388
    %v467 = vadd.f32 %v289, %v391
    %v468 = vadd.f32 %v290, %v393
    %v469 = vadd.f32 %v291, %v396
    %v470 = vadd.f32 %v292, %v398
    %v471 = vadd.f32 %v293, %v401
    %v472 = vadd.f32 %v294, %v403
    %v473 = vadd.f32 %v295, %v406
    %v474 = vadd.f32 %v296, %v408
    %v475 = vadd.f32 %v297, %v411
    %v476 = vadd.f32 %v298, %v413
    %v477 = vadd.f32 %v299, %v416
    %v478 = vadd.f32 %v300, %v418
    %v479 = vadd.f32 %v301, %v421
    %v480 = vadd.f32 %v302, %v423
    %v481 = vadd.f32 %v303, %v426
    %v482 = vadd.f32 %v304, %v428
    %v483 = vadd.f32 %v305, %v431
    %v484 = vadd.f32 %v306, %v433
    %v485 = vadd.f32 %v307, %v436
    %v486 = vadd.f32 %v308, %v438
    %v487 = vadd.f32 %v309, %v441
    %v488 = vadd.f32 %v310, %v443
    %v489 = vadd.f32 %v311, %v446
    %v490 = vadd.f32 %v312, %v448
    %v491 = vadd.f32 %v313, %v451
    %v492 = vadd.f32 %v314, %v453
    %v493 = vadd.f32 %v315, %v456
    %v494 = vadd.f32 %v316, %v458
    %v495 = vadd.f32 %v317, %v461
    %v496 = vadd.f32 %v318, %v463
    %497 = vst [vmem:[#allocation2] sm:$0xff] %v465
    %498 = vst [vmem:[#allocation2 + $0x8] sm:$0xff] %v466
    %499 = vst [vmem:[#allocation2 + $0x10] sm:$0xff] %v467
    %500 = vst [vmem:[#allocation2 + $0x18] sm:$0xff] %v468
    %501 = vst [vmem:[#allocation2 + $0x20] sm:$0xff] %v469
    %502 = vst [vmem:[#allocation2 + $0x28] sm:$0xff] %v470
    %503 = vst [vmem:[#allocation2 + $0x30] sm:$0xff] %v471
    %504 = vst [vmem:[#allocation2 + $0x38] sm:$0xff] %v472
    %505 = vst [vmem:[#allocation2 + $0x40] sm:$0xff] %v473
    %506 = vst [vmem:[#allocation2 + $0x48] sm:$0xff] %v474
    %507 = vst [vmem:[#allocation2 + $0x50] sm:$0xff] %v475
    %508 = vst [vmem:[#allocation2 + $0x58] sm:$0xff] %v476
    %509 = vst [vmem:[#allocation2 + $0x60] sm:$0xff] %v477
    %510 = vst [vmem:[#allocation2 + $0x68] sm:$0xff] %v478
    %511 = vst [vmem:[#allocation2 + $0x70] sm:$0xff] %v479
    %512 = vst [vmem:[#allocation2 + $0x78] sm:$0xff] %v480
    %513 = vst [vmem:[#allocation2 + $0x80] sm:$0xff] %v481
    %514 = vst [vmem:[#allocation2 + $0x88] sm:$0xff] %v482
    %515 = vst [vmem:[#allocation2 + $0x90] sm:$0xff] %v483
    %516 = vst [vmem:[#allocation2 + $0x98] sm:$0xff] %v484
    %517 = vst [vmem:[#allocation2 + $0xa0] sm:$0xff] %v485
    %518 = vst [vmem:[#allocation2 + $0xa8] sm:$0xff] %v486
    %519 = vst [vmem:[#allocation2 + $0xb0] sm:$0xff] %v487
    %520 = vst [vmem:[#allocation2 + $0xb8] sm:$0xff] %v488
    %521 = vst [vmem:[#allocation2 + $0xc0] sm:$0xff] %v489
    %522 = vst [vmem:[#allocation2 + $0xc8] sm:$0xff] %v490
    %523 = vst [vmem:[#allocation2 + $0xd0] sm:$0xff] %v491
    %524 = vst [vmem:[#allocation2 + $0xd8] sm:$0xff] %v492
    %525 = vst [vmem:[#allocation2 + $0xe0] sm:$0xff] %v493
    %526 = vst [vmem:[#allocation2 + $0xe8] sm:$0xff] %v494
    %527 = vst [vmem:[#allocation2 + $0xf0] sm:$0xff] %v495
    %528 = vst [vmem:[#allocation2 + $0xf8] sm:$0xff] %v496
    %v529 = vld [vmem:[#allocation2] sm:$0xff]
    %v530 = vld [vmem:[#allocation2 + $0x8] sm:$0xff]
    %v531 = vld [vmem:[#allocation2 + $0x10] sm:$0xff]
    %v532 = vld [vmem:[#allocation2 + $0x18] sm:$0xff]
    %v533 = vld [vmem:[#allocation2 + $0x20] sm:$0xff]
    %v534 = vld [vmem:[#allocation2 + $0x28] sm:$0xff]
    %v535 = vld [vmem:[#allocation2 + $0x30] sm:$0xff]
    %v536 = vld [vmem:[#allocation2 + $0x38] sm:$0xff]
    %v537 = vld [vmem:[#allocation2 + $0x40] sm:$0xff]
    %v538 = vld [vmem:[#allocation2 + $0x48] sm:$0xff]
    %v539 = vld [vmem:[#allocation2 + $0x50] sm:$0xff]
    %v540 = vld [vmem:[#allocation2 + $0x58] sm:$0xff]
    %v541 = vld [vmem:[#allocation2 + $0x60] sm:$0xff]
    %v542 = vld [vmem:[#allocation2 + $0x68] sm:$0xff]
    %v543 = vld [vmem:[#allocation2 + $0x70] sm:$0xff]
    %v544 = vld [vmem:[#allocation2 + $0x78] sm:$0xff]
    %v545 = vld [vmem:[#allocation2 + $0x80] sm:$0xff]
    %v546 = vld [vmem:[#allocation2 + $0x88] sm:$0xff]
    %v547 = vld [vmem:[#allocation2 + $0x90] sm:$0xff]
    %v548 = vld [vmem:[#allocation2 + $0x98] sm:$0xff]
    %v549 = vld [vmem:[#allocation2 + $0xa0] sm:$0xff]
    %v550 = vld [vmem:[#allocation2 + $0xa8] sm:$0xff]
    %v551 = vld [vmem:[#allocation2 + $0xb0] sm:$0xff]
    %v552 = vld [vmem:[#allocation2 + $0xb8] sm:$0xff]
    %v553 = vld [vmem:[#allocation2 + $0xc0] sm:$0xff]
    %v554 = vld [vmem:[#allocation2 + $0xc8] sm:$0xff]
    %v555 = vld [vmem:[#allocation2 + $0xd0] sm:$0xff]
    %v556 = vld [vmem:[#allocation2 + $0xd8] sm:$0xff]
    %v557 = vld [vmem:[#allocation2 + $0xe0] sm:$0xff]
    %v558 = vld [vmem:[#allocation2 + $0xe8] sm:$0xff]
    %v559 = vld [vmem:[#allocation2 + $0xf0] sm:$0xff]
    %v560 = vld [vmem:[#allocation2 + $0xf8] sm:$0xff]
    %s561 = scalar_lea.vmem %s1, 8
    %v562 = vld [vmem:[%s561] sm:$0xf]
    %v563 = vld [vmem:[%s561 + $0x4] sm:$0xf]
    %v566 = vunpack.c.l.b16 %v562
    %v567 = vunpack.c.l.b16 %v563
    %v568 = vpack.c.b16 %v567, %v566
    %570 = vmatpush.bf16.msra.mxu0 0
    %571 = vmatpush.bf16.msra.mxu0 0
    %572 = vmatpush.bf16.msra.mxu0 0
    %573 = vmatpush.bf16.msra.mxu0 0
    %574 = vmatpush.bf16.msra.mxu0 0
    %575 = vmatpush.bf16.msra.mxu0 0
    %576 = vmatpush.bf16.msra.mxu0 0
    %577 = vmatpush.bf16.msra.mxu0 %v568
    %578 = vmatmul.bf16.gmra.mxu0 %v329
    %v579 = vpop.f32.mrf.mxu0
    %v580 = vadd.f32 0.0, %v579
    %v581 = vpop.f32.mrf.mxu0
    %v582 = vadd.f32 0.0, %v581
    %583 = vmatmul.bf16.gmra.mxu0 %v332
    %v584 = vpop.f32.mrf.mxu0
    %v585 = vadd.f32 0.0, %v584
    %v586 = vpop.f32.mrf.mxu0
    %v587 = vadd.f32 0.0, %v586
    %588 = vmatmul.bf16.gmra.mxu0 %v335
    %v589 = vpop.f32.mrf.mxu0
    %v590 = vadd.f32 0.0, %v589
    %v591 = vpop.f32.mrf.mxu0
    %v592 = vadd.f32 0.0, %v591
    %593 = vmatmul.bf16.gmra.mxu0 %v338
    %v594 = vpop.f32.mrf.mxu0
    %v595 = vadd.f32 0.0, %v594
    %v596 = vpop.f32.mrf.mxu0
    %v597 = vadd.f32 0.0, %v596
    %598 = vmatmul.bf16.gmra.mxu0 %v341
    %v599 = vpop.f32.mrf.mxu0
    %v600 = vadd.f32 0.0, %v599
    %v601 = vpop.f32.mrf.mxu0
    %v602 = vadd.f32 0.0, %v601
    %603 = vmatmul.bf16.gmra.mxu0 %v344
    %v604 = vpop.f32.mrf.mxu0
    %v605 = vadd.f32 0.0, %v604
    %v606 = vpop.f32.mrf.mxu0
    %v607 = vadd.f32 0.0, %v606
    %608 = vmatmul.bf16.gmra.mxu0 %v347
    %v609 = vpop.f32.mrf.mxu0
    %v610 = vadd.f32 0.0, %v609
    %v611 = vpop.f32.mrf.mxu0
    %v612 = vadd.f32 0.0, %v611
    %613 = vmatmul.bf16.gmra.mxu0 %v350
    %v614 = vpop.f32.mrf.mxu0
    %v615 = vadd.f32 0.0, %v614
    %v616 = vpop.f32.mrf.mxu0
    %v617 = vadd.f32 0.0, %v616
    %618 = vmatmul.bf16.gmra.mxu0 %v353
    %v619 = vpop.f32.mrf.mxu0
    %v620 = vadd.f32 0.0, %v619
    %v621 = vpop.f32.mrf.mxu0
    %v622 = vadd.f32 0.0, %v621
    %623 = vmatmul.bf16.gmra.mxu0 %v356
    %v624 = vpop.f32.mrf.mxu0
    %v625 = vadd.f32 0.0, %v624
    %v626 = vpop.f32.mrf.mxu0
    %v627 = vadd.f32 0.0, %v626
    %628 = vmatmul.bf16.gmra.mxu0 %v359
    %v629 = vpop.f32.mrf.mxu0
    %v630 = vadd.f32 0.0, %v629
    %v631 = vpop.f32.mrf.mxu0
    %v632 = vadd.f32 0.0, %v631
    %633 = vmatmul.bf16.gmra.mxu0 %v362
    %v634 = vpop.f32.mrf.mxu0
    %v635 = vadd.f32 0.0, %v634
    %v636 = vpop.f32.mrf.mxu0
    %v637 = vadd.f32 0.0, %v636
    %638 = vmatmul.bf16.gmra.mxu0 %v365
    %v639 = vpop.f32.mrf.mxu0
    %v640 = vadd.f32 0.0, %v639
    %v641 = vpop.f32.mrf.mxu0
    %v642 = vadd.f32 0.0, %v641
    %643 = vmatmul.bf16.gmra.mxu0 %v368
    %v644 = vpop.f32.mrf.mxu0
    %v645 = vadd.f32 0.0, %v644
    %v646 = vpop.f32.mrf.mxu0
    %v647 = vadd.f32 0.0, %v646
    %648 = vmatmul.bf16.gmra.mxu0 %v371
    %v649 = vpop.f32.mrf.mxu0
    %v650 = vadd.f32 0.0, %v649
    %v651 = vpop.f32.mrf.mxu0
    %v652 = vadd.f32 0.0, %v651
    %653 = vmatmul.bf16.gmra.mxu0 %v374
    %v654 = vpop.f32.mrf.mxu0
    %v655 = vadd.f32 0.0, %v654
    %v656 = vpop.f32.mrf.mxu0
    %v657 = vadd.f32 0.0, %v656
    %658 = vdwg.mxu0
    %v659 = vadd.f32 %v529, %v580
    %v660 = vadd.f32 %v530, %v582
    %v661 = vadd.f32 %v531, %v585
    %v662 = vadd.f32 %v532, %v587
    %v663 = vadd.f32 %v533, %v590
    %v664 = vadd.f32 %v534, %v592
    %v665 = vadd.f32 %v535, %v595
    %v666 = vadd.f32 %v536, %v597
    %v667 = vadd.f32 %v537, %v600
    %v668 = vadd.f32 %v538, %v602
    %v669 = vadd.f32 %v539, %v605
    %v670 = vadd.f32 %v540, %v607
    %v671 = vadd.f32 %v541, %v610
    %v672 = vadd.f32 %v542, %v612
    %v673 = vadd.f32 %v543, %v615
    %v674 = vadd.f32 %v544, %v617
    %v675 = vadd.f32 %v545, %v620
    %v676 = vadd.f32 %v546, %v622
    %v677 = vadd.f32 %v547, %v625
    %v678 = vadd.f32 %v548, %v627
    %v679 = vadd.f32 %v549, %v630
    %v680 = vadd.f32 %v550, %v632
    %v681 = vadd.f32 %v551, %v635
    %v682 = vadd.f32 %v552, %v637
    %v683 = vadd.f32 %v553, %v640
    %v684 = vadd.f32 %v554, %v642
    %v685 = vadd.f32 %v555, %v645
    %v686 = vadd.f32 %v556, %v647
    %v687 = vadd.f32 %v557, %v650
    %v688 = vadd.f32 %v558, %v652
    %v689 = vadd.f32 %v559, %v655
    %v690 = vadd.f32 %v560, %v657
    %691 = vst [vmem:[#allocation2] sm:$0xff] %v659
    %692 = vst [vmem:[#allocation2 + $0x8] sm:$0xff] %v660
    %693 = vst [vmem:[#allocation2 + $0x10] sm:$0xff] %v661
    %694 = vst [vmem:[#allocation2 + $0x18] sm:$0xff] %v662
    %695 = vst [vmem:[#allocation2 + $0x20] sm:$0xff] %v663
    %696 = vst [vmem:[#allocation2 + $0x28] sm:$0xff] %v664
    %697 = vst [vmem:[#allocation2 + $0x30] sm:$0xff] %v665
    %698 = vst [vmem:[#allocation2 + $0x38] sm:$0xff] %v666
    %699 = vst [vmem:[#allocation2 + $0x40] sm:$0xff] %v667
    %700 = vst [vmem:[#allocation2 + $0x48] sm:$0xff] %v668
    %701 = vst [vmem:[#allocation2 + $0x50] sm:$0xff] %v669
    %702 = vst [vmem:[#allocation2 + $0x58] sm:$0xff] %v670
    %703 = vst [vmem:[#allocation2 + $0x60] sm:$0xff] %v671
    %704 = vst [vmem:[#allocation2 + $0x68] sm:$0xff] %v672
    %705 = vst [vmem:[#allocation2 + $0x70] sm:$0xff] %v673
    %706 = vst [vmem:[#allocation2 + $0x78] sm:$0xff] %v674
    %707 = vst [vmem:[#allocation2 + $0x80] sm:$0xff] %v675
    %708 = vst [vmem:[#allocation2 + $0x88] sm:$0xff] %v676
    %709 = vst [vmem:[#allocation2 + $0x90] sm:$0xff] %v677
    %710 = vst [vmem:[#allocation2 + $0x98] sm:$0xff] %v678
    %711 = vst [vmem:[#allocation2 + $0xa0] sm:$0xff] %v679
    %712 = vst [vmem:[#allocation2 + $0xa8] sm:$0xff] %v680
    %713 = vst [vmem:[#allocation2 + $0xb0] sm:$0xff] %v681
    %714 = vst [vmem:[#allocation2 + $0xb8] sm:$0xff] %v682
    %715 = vst [vmem:[#allocation2 + $0xc0] sm:$0xff] %v683
    %716 = vst [vmem:[#allocation2 + $0xc8] sm:$0xff] %v684
    %717 = vst [vmem:[#allocation2 + $0xd0] sm:$0xff] %v685
    %718 = vst [vmem:[#allocation2 + $0xd8] sm:$0xff] %v686
    %719 = vst [vmem:[#allocation2 + $0xe0] sm:$0xff] %v687
    %720 = vst [vmem:[#allocation2 + $0xe8] sm:$0xff] %v688
    %721 = vst [vmem:[#allocation2 + $0xf0] sm:$0xff] %v689
    %722 = vst [vmem:[#allocation2 + $0xf8] sm:$0xff] %v690
    %v723 = vld [vmem:[#allocation2] sm:$0xff]
    %v724 = vld [vmem:[#allocation2 + $0x8] sm:$0xff]
    %v725 = vld [vmem:[#allocation2 + $0x10] sm:$0xff]
    %v726 = vld [vmem:[#allocation2 + $0x18] sm:$0xff]
    %v727 = vld [vmem:[#allocation2 + $0x20] sm:$0xff]
    %v728 = vld [vmem:[#allocation2 + $0x28] sm:$0xff]
    %v729 = vld [vmem:[#allocation2 + $0x30] sm:$0xff]
    %v730 = vld [vmem:[#allocation2 + $0x38] sm:$0xff]
    %v731 = vld [vmem:[#allocation2 + $0x40] sm:$0xff]
    %v732 = vld [vmem:[#allocation2 + $0x48] sm:$0xff]
    %v733 = vld [vmem:[#allocation2 + $0x50] sm:$0xff]
    %v734 = vld [vmem:[#allocation2 + $0x58] sm:$0xff]
    %v735 = vld [vmem:[#allocation2 + $0x60] sm:$0xff]
    %v736 = vld [vmem:[#allocation2 + $0x68] sm:$0xff]
    %v737 = vld [vmem:[#allocation2 + $0x70] sm:$0xff]
    %v738 = vld [vmem:[#allocation2 + $0x78] sm:$0xff]
    %v739 = vld [vmem:[#allocation2 + $0x80] sm:$0xff]
    %v740 = vld [vmem:[#allocation2 + $0x88] sm:$0xff]
    %v741 = vld [vmem:[#allocation2 + $0x90] sm:$0xff]
    %v742 = vld [vmem:[#allocation2 + $0x98] sm:$0xff]
    %v743 = vld [vmem:[#allocation2 + $0xa0] sm:$0xff]
    %v744 = vld [vmem:[#allocation2 + $0xa8] sm:$0xff]
    %v745 = vld [vmem:[#allocation2 + $0xb0] sm:$0xff]
    %v746 = vld [vmem:[#allocation2 + $0xb8] sm:$0xff]
    %v747 = vld [vmem:[#allocation2 + $0xc0] sm:$0xff]
    %v748 = vld [vmem:[#allocation2 + $0xc8] sm:$0xff]
    %v749 = vld [vmem:[#allocation2 + $0xd0] sm:$0xff]
    %v750 = vld [vmem:[#allocation2 + $0xd8] sm:$0xff]
    %v751 = vld [vmem:[#allocation2 + $0xe0] sm:$0xff]
    %v752 = vld [vmem:[#allocation2 + $0xe8] sm:$0xff]
    %v753 = vld [vmem:[#allocation2 + $0xf0] sm:$0xff]
    %v754 = vld [vmem:[#allocation2 + $0xf8] sm:$0xff]
    %s755 = scalar_lea.vmem %s1, 16
    %v756 = vld [vmem:[%s755] sm:$0xf]
    %v757 = vld [vmem:[%s755 + $0x4] sm:$0xf]
    %v760 = vunpack.c.l.b16 %v756
    %v761 = vunpack.c.l.b16 %v757
    %v762 = vpack.c.b16 %v761, %v760
    %764 = vmatpush.bf16.msra.mxu0 0
    %765 = vmatpush.bf16.msra.mxu0 0
    %766 = vmatpush.bf16.msra.mxu0 0
    %767 = vmatpush.bf16.msra.mxu0 0
    %768 = vmatpush.bf16.msra.mxu0 0
    %769 = vmatpush.bf16.msra.mxu0 0
    %770 = vmatpush.bf16.msra.mxu0 0
    %771 = vmatpush.bf16.msra.mxu0 %v762
    %772 = vmatmul.bf16.gmra.mxu0 %v329
    %v773 = vpop.f32.mrf.mxu0
    %v774 = vadd.f32 0.0, %v773
    %v775 = vpop.f32.mrf.mxu0
    %v776 = vadd.f32 0.0, %v775
    %777 = vmatmul.bf16.gmra.mxu0 %v332
    %v778 = vpop.f32.mrf.mxu0
    %v779 = vadd.f32 0.0, %v778
    %v780 = vpop.f32.mrf.mxu0
    %v781 = vadd.f32 0.0, %v780
    %782 = vmatmul.bf16.gmra.mxu0 %v335
    %v783 = vpop.f32.mrf.mxu0
    %v784 = vadd.f32 0.0, %v783
    %v785 = vpop.f32.mrf.mxu0
    %v786 = vadd.f32 0.0, %v785
    %787 = vmatmul.bf16.gmra.mxu0 %v338
    %v788 = vpop.f32.mrf.mxu0
    %v789 = vadd.f32 0.0, %v788
    %v790 = vpop.f32.mrf.mxu0
    %v791 = vadd.f32 0.0, %v790
    %792 = vmatmul.bf16.gmra.mxu0 %v341
    %v793 = vpop.f32.mrf.mxu0
    %v794 = vadd.f32 0.0, %v793
    %v795 = vpop.f32.mrf.mxu0
    %v796 = vadd.f32 0.0, %v795
    %797 = vmatmul.bf16.gmra.mxu0 %v344
    %v798 = vpop.f32.mrf.mxu0
    %v799 = vadd.f32 0.0, %v798
    %v800 = vpop.f32.mrf.mxu0
    %v801 = vadd.f32 0.0, %v800
    %802 = vmatmul.bf16.gmra.mxu0 %v347
    %v803 = vpop.f32.mrf.mxu0
    %v804 = vadd.f32 0.0, %v803
    %v805 = vpop.f32.mrf.mxu0
    %v806 = vadd.f32 0.0, %v805
    %807 = vmatmul.bf16.gmra.mxu0 %v350
    %v808 = vpop.f32.mrf.mxu0
    %v809 = vadd.f32 0.0, %v808
    %v810 = vpop.f32.mrf.mxu0
    %v811 = vadd.f32 0.0, %v810
    %812 = vmatmul.bf16.gmra.mxu0 %v353
    %v813 = vpop.f32.mrf.mxu0
    %v814 = vadd.f32 0.0, %v813
    %v815 = vpop.f32.mrf.mxu0
    %v816 = vadd.f32 0.0, %v815
    %817 = vmatmul.bf16.gmra.mxu0 %v356
    %v818 = vpop.f32.mrf.mxu0
    %v819 = vadd.f32 0.0, %v818
    %v820 = vpop.f32.mrf.mxu0
    %v821 = vadd.f32 0.0, %v820
    %822 = vmatmul.bf16.gmra.mxu0 %v359
    %v823 = vpop.f32.mrf.mxu0
    %v824 = vadd.f32 0.0, %v823
    %v825 = vpop.f32.mrf.mxu0
    %v826 = vadd.f32 0.0, %v825
    %827 = vmatmul.bf16.gmra.mxu0 %v362
    %v828 = vpop.f32.mrf.mxu0
    %v829 = vadd.f32 0.0, %v828
    %v830 = vpop.f32.mrf.mxu0
    %v831 = vadd.f32 0.0, %v830
    %832 = vmatmul.bf16.gmra.mxu0 %v365
    %v833 = vpop.f32.mrf.mxu0
    %v834 = vadd.f32 0.0, %v833
    %v835 = vpop.f32.mrf.mxu0
    %v836 = vadd.f32 0.0, %v835
    %837 = vmatmul.bf16.gmra.mxu0 %v368
    %v838 = vpop.f32.mrf.mxu0
    %v839 = vadd.f32 0.0, %v838
    %v840 = vpop.f32.mrf.mxu0
    %v841 = vadd.f32 0.0, %v840
    %842 = vmatmul.bf16.gmra.mxu0 %v371
    %v843 = vpop.f32.mrf.mxu0
    %v844 = vadd.f32 0.0, %v843
    %v845 = vpop.f32.mrf.mxu0
    %v846 = vadd.f32 0.0, %v845
    %847 = vmatmul.bf16.gmra.mxu0 %v374
    %v848 = vpop.f32.mrf.mxu0
    %v849 = vadd.f32 0.0, %v848
    %v850 = vpop.f32.mrf.mxu0
    %v851 = vadd.f32 0.0, %v850
    %852 = vdwg.mxu0
    %v853 = vadd.f32 %v723, %v774
    %v854 = vadd.f32 %v724, %v776
    %v855 = vadd.f32 %v725, %v779
    %v856 = vadd.f32 %v726, %v781
    %v857 = vadd.f32 %v727, %v784
    %v858 = vadd.f32 %v728, %v786
    %v859 = vadd.f32 %v729, %v789
    %v860 = vadd.f32 %v730, %v791
    %v861 = vadd.f32 %v731, %v794
    %v862 = vadd.f32 %v732, %v796
    %v863 = vadd.f32 %v733, %v799
    %v864 = vadd.f32 %v734, %v801
    %v865 = vadd.f32 %v735, %v804
    %v866 = vadd.f32 %v736, %v806
    %v867 = vadd.f32 %v737, %v809
    %v868 = vadd.f32 %v738, %v811
    %v869 = vadd.f32 %v739, %v814
    %v870 = vadd.f32 %v740, %v816
    %v871 = vadd.f32 %v741, %v819
    %v872 = vadd.f32 %v742, %v821
    %v873 = vadd.f32 %v743, %v824
    %v874 = vadd.f32 %v744, %v826
    %v875 = vadd.f32 %v745, %v829
    %v876 = vadd.f32 %v746, %v831
    %v877 = vadd.f32 %v747, %v834
    %v878 = vadd.f32 %v748, %v836
    %v879 = vadd.f32 %v749, %v839
    %v880 = vadd.f32 %v750, %v841
    %v881 = vadd.f32 %v751, %v844
    %v882 = vadd.f32 %v752, %v846
    %v883 = vadd.f32 %v753, %v849
    %v884 = vadd.f32 %v754, %v851
    %885 = vst [vmem:[#allocation2] sm:$0xff] %v853
    %886 = vst [vmem:[#allocation2 + $0x8] sm:$0xff] %v854
    %887 = vst [vmem:[#allocation2 + $0x10] sm:$0xff] %v855
    %888 = vst [vmem:[#allocation2 + $0x18] sm:$0xff] %v856
    %889 = vst [vmem:[#allocation2 + $0x20] sm:$0xff] %v857
    %890 = vst [vmem:[#allocation2 + $0x28] sm:$0xff] %v858
    %891 = vst [vmem:[#allocation2 + $0x30] sm:$0xff] %v859
    %892 = vst [vmem:[#allocation2 + $0x38] sm:$0xff] %v860
    %893 = vst [vmem:[#allocation2 + $0x40] sm:$0xff] %v861
    %894 = vst [vmem:[#allocation2 + $0x48] sm:$0xff] %v862
    %895 = vst [vmem:[#allocation2 + $0x50] sm:$0xff] %v863
    %896 = vst [vmem:[#allocation2 + $0x58] sm:$0xff] %v864
    %897 = vst [vmem:[#allocation2 + $0x60] sm:$0xff] %v865
    %898 = vst [vmem:[#allocation2 + $0x68] sm:$0xff] %v866
    %899 = vst [vmem:[#allocation2 + $0x70] sm:$0xff] %v867
    %900 = vst [vmem:[#allocation2 + $0x78] sm:$0xff] %v868
    %901 = vst [vmem:[#allocation2 + $0x80] sm:$0xff] %v869
    %902 = vst [vmem:[#allocation2 + $0x88] sm:$0xff] %v870
    %903 = vst [vmem:[#allocation2 + $0x90] sm:$0xff] %v871
    %904 = vst [vmem:[#allocation2 + $0x98] sm:$0xff] %v872
    %905 = vst [vmem:[#allocation2 + $0xa0] sm:$0xff] %v873
    %906 = vst [vmem:[#allocation2 + $0xa8] sm:$0xff] %v874
    %907 = vst [vmem:[#allocation2 + $0xb0] sm:$0xff] %v875
    %908 = vst [vmem:[#allocation2 + $0xb8] sm:$0xff] %v876
    %909 = vst [vmem:[#allocation2 + $0xc0] sm:$0xff] %v877
    %910 = vst [vmem:[#allocation2 + $0xc8] sm:$0xff] %v878
    %911 = vst [vmem:[#allocation2 + $0xd0] sm:$0xff] %v879
    %912 = vst [vmem:[#allocation2 + $0xd8] sm:$0xff] %v880
    %913 = vst [vmem:[#allocation2 + $0xe0] sm:$0xff] %v881
    %914 = vst [vmem:[#allocation2 + $0xe8] sm:$0xff] %v882
    %915 = vst [vmem:[#allocation2 + $0xf0] sm:$0xff] %v883
    %916 = vst [vmem:[#allocation2 + $0xf8] sm:$0xff] %v884
    %v917 = vld [vmem:[#allocation2] sm:$0xff]
    %v918 = vld [vmem:[#allocation2 + $0x8] sm:$0xff]
    %v919 = vld [vmem:[#allocation2 + $0x10] sm:$0xff]
    %v920 = vld [vmem:[#allocation2 + $0x18] sm:$0xff]
    %v921 = vld [vmem:[#allocation2 + $0x20] sm:$0xff]
    %v922 = vld [vmem:[#allocation2 + $0x28] sm:$0xff]
    %v923 = vld [vmem:[#allocation2 + $0x30] sm:$0xff]
    %v924 = vld [vmem:[#allocation2 + $0x38] sm:$0xff]
    %v925 = vld [vmem:[#allocation2 + $0x40] sm:$0xff]
    %v926 = vld [vmem:[#allocation2 + $0x48] sm:$0xff]
    %v927 = vld [vmem:[#allocation2 + $0x50] sm:$0xff]
    %v928 = vld [vmem:[#allocation2 + $0x58] sm:$0xff]
    %v929 = vld [vmem:[#allocation2 + $0x60] sm:$0xff]
    %v930 = vld [vmem:[#allocation2 + $0x68] sm:$0xff]
    %v931 = vld [vmem:[#allocation2 + $0x70] sm:$0xff]
    %v932 = vld [vmem:[#allocation2 + $0x78] sm:$0xff]
    %v933 = vld [vmem:[#allocation2 + $0x80] sm:$0xff]
    %v934 = vld [vmem:[#allocation2 + $0x88] sm:$0xff]
    %v935 = vld [vmem:[#allocation2 + $0x90] sm:$0xff]
    %v936 = vld [vmem:[#allocation2 + $0x98] sm:$0xff]
    %v937 = vld [vmem:[#allocation2 + $0xa0] sm:$0xff]
    %v938 = vld [vmem:[#allocation2 + $0xa8] sm:$0xff]
    %v939 = vld [vmem:[#allocation2 + $0xb0] sm:$0xff]
    %v940 = vld [vmem:[#allocation2 + $0xb8] sm:$0xff]
    %v941 = vld [vmem:[#allocation2 + $0xc0] sm:$0xff]
    %v942 = vld [vmem:[#allocation2 + $0xc8] sm:$0xff]
    %v943 = vld [vmem:[#allocation2 + $0xd0] sm:$0xff]
    %v944 = vld [vmem:[#allocation2 + $0xd8] sm:$0xff]
    %v945 = vld [vmem:[#allocation2 + $0xe0] sm:$0xff]
    %v946 = vld [vmem:[#allocation2 + $0xe8] sm:$0xff]
    %v947 = vld [vmem:[#allocation2 + $0xf0] sm:$0xff]
    %v948 = vld [vmem:[#allocation2 + $0xf8] sm:$0xff]
    %949 = vst [vmem:[#allocation3] sm:$0xff] %v917
    %950 = vst [vmem:[#allocation3 + $0x8] sm:$0xff] %v918
    %951 = vst [vmem:[#allocation3 + $0x10] sm:$0xff] %v919
    %952 = vst [vmem:[#allocation3 + $0x18] sm:$0xff] %v920
    %953 = vst [vmem:[#allocation3 + $0x20] sm:$0xff] %v921
    %954 = vst [vmem:[#allocation3 + $0x28] sm:$0xff] %v922
    %955 = vst [vmem:[#allocation3 + $0x30] sm:$0xff] %v923
    %956 = vst [vmem:[#allocation3 + $0x38] sm:$0xff] %v924
    %957 = vst [vmem:[#allocation3 + $0x40] sm:$0xff] %v925
    %958 = vst [vmem:[#allocation3 + $0x48] sm:$0xff] %v926
    %959 = vst [vmem:[#allocation3 + $0x50] sm:$0xff] %v927
    %960 = vst [vmem:[#allocation3 + $0x58] sm:$0xff] %v928
    %961 = vst [vmem:[#allocation3 + $0x60] sm:$0xff] %v929
    %962 = vst [vmem:[#allocation3 + $0x68] sm:$0xff] %v930
    %963 = vst [vmem:[#allocation3 + $0x70] sm:$0xff] %v931
    %964 = vst [vmem:[#allocation3 + $0x78] sm:$0xff] %v932
    %965 = vst [vmem:[#allocation3 + $0x80] sm:$0xff] %v933
    %966 = vst [vmem:[#allocation3 + $0x88] sm:$0xff] %v934
    %967 = vst [vmem:[#allocation3 + $0x90] sm:$0xff] %v935
    %968 = vst [vmem:[#allocation3 + $0x98] sm:$0xff] %v936
    %969 = vst [vmem:[#allocation3 + $0xa0] sm:$0xff] %v937
    %970 = vst [vmem:[#allocation3 + $0xa8] sm:$0xff] %v938
    %971 = vst [vmem:[#allocation3 + $0xb0] sm:$0xff] %v939
    %972 = vst [vmem:[#allocation3 + $0xb8] sm:$0xff] %v940
    %973 = vst [vmem:[#allocation3 + $0xc0] sm:$0xff] %v941
    %974 = vst [vmem:[#allocation3 + $0xc8] sm:$0xff] %v942
    %975 = vst [vmem:[#allocation3 + $0xd0] sm:$0xff] %v943
    %976 = vst [vmem:[#allocation3 + $0xd8] sm:$0xff] %v944
    %977 = vst [vmem:[#allocation3 + $0xe0] sm:$0xff] %v945
    %978 = vst [vmem:[#allocation3 + $0xe8] sm:$0xff] %v946
    %979 = vst [vmem:[#allocation3 + $0xf0] sm:$0xff] %v947
    %980 = vst [vmem:[#allocation3 + $0xf8] sm:$0xff] %v948
    // Predicated region
    $region10: #{tpu_custom_call.1} parent=1 // pred_check
      _
    $region11: #{tpu_custom_call.1} parent=1 // pred_check_branch
      %982 = sbr.rel (0) target = $region13
    $region12: #{tpu_custom_call.1} parent=1 // pred_region
      %984 = vsyncadd [#allocation4], 0
      %s985 = sshll.u32 [#allocation3], 4
      %s986 = int_to_ptr.vmem [resolvable:$true] %s985
      %s987 = sshll.u32 %s2, 4
      %s988 = int_to_ptr.hbm [resolvable:$true] %s987
      %993 = dma.vmem_to_hbm [thread:$0]  %s986, 4096, %s988, [#allocation4], 128, 128, 8
    $region13: #{tpu_custom_call.1} parent=1 // pred_fallthru
      _
    // Predicated region
    $region14: #{tpu_custom_call.1} parent=1 // pred_check
      _
    $region15: #{tpu_custom_call.1} parent=1 // pred_check_branch
      %995 = sbr.rel (0) target = $region17
    $region16: #{tpu_custom_call.1} parent=1 // pred_region
      %997 = dma.done [#allocation4], 4096
    $region17: #{tpu_custom_call.1} parent=1 // pred_fallthru
      _
    %998 = vsyncpa [#allocation4], 1

</llo_original>
